<compile_context>
chip_gen: v7x
topology: tpu7x:2x2x1
jax: 0.10.0
libtpu: 0.0.40
codegen_flags: <defaults>
</compile_context>

<pallas_src>
import math
import functools

import jax
import jax.numpy as jnp
from jax.experimental import pallas as pl
from jax.experimental.pallas import tpu as pltpu


# MXU input dtype for the 1x1-conv matmuls.  float32 == exact PyTorch parity;
# switch to jnp.bfloat16 on v6e/v7x after tolerance validation (one-line change).
_MXU_DTYPE = jnp.float32


# ---------------------------------------------------------------------------
# Pallas kernel: fully fused GAEdgeConvAttn stage (conv1 + conv2 + pools)
# ---------------------------------------------------------------------------
def _ga_stage_kernel(x_ref, w1_ref, fc11_ref, fc12_ref,
                     w2b_ref, w2a_ref, fc21_ref, fc22_ref,
                     out_ref, ys1_ref, p1_ref, sq1_ref, sq2_ref,
                     *, batch, nsample):
    """Fused GAEdgeConv stage.

    Layouts (batch folded into the lane axis, npoint minor; columns ordered (b,s,p)):
      x_ref   : (Cin_pad, B*S*P)   grouped 'dp_df' features (zero-padded channels)
      w1_ref  : (C1, Cin_pad)      conv1 weight (zero-padded columns)
      fc11/12 : (mid1, C1)/(C1, mid1)  conv1 channel-attn (bias-free)
      w2b_ref : (C2, C1)           W2[:, C1:]   (acts on fj)
      w2a_ref : (C2, C1)           W2[:, :C1]   (acts on pooled)
      fc21/22 : (mid2, C2)/(C2, mid2)  conv2 channel-attn
      out_ref : (C2, B*P)          final pooled activation, columns ordered (b, p)
      ys1_ref : (C1, B*S*P) VMEM scratch — conv1 activation (never leaves the chip)
      p1_ref  : (C1, B*P)   VMEM scratch — conv1 pooled activation
      sq1_ref : (C1, B)     VMEM scratch — conv1 attn squeeze (batched FC input)
      sq2_ref : (C2, B)     VMEM scratch — conv2 attn squeeze
    """
    B = batch
    S = nsample
    BM = x_ref.shape[1]
    M = BM // B                     # elements per (batch, channel) instance
    P = M // S                      # npoint
    inv_m = 1.0 / M

    x = x_ref[...].astype(_MXU_DTYPE)
    w1 = w1_ref[...].astype(_MXU_DTYPE)
    # pointwise conv == one channel-dim matmul over all batches/points (MXU, N = B*M)
    y1 = jnp.dot(w1, x, preferred_element_type=jnp.float32)           # (C1, B*M)

    # ---- conv1: per-(batch, channel) InstanceNorm2d (eps=1e-5, no affine) + ReLU ----
    for b in range(B):
        yb = y1[:, b * M:(b + 1) * M]
        mu = jnp.sum(yb, axis=1, keepdims=True) * inv_m
        ey2 = jnp.sum(yb * yb, axis=1, keepdims=True) * inv_m
        var = jnp.maximum(ey2 - mu * mu, 0.0)
        yn = jnp.maximum((yb - mu) * jax.lax.rsqrt(var + 1e-5), 0.0)  # + ReLU
        ys1_ref[:, b * M:(b + 1) * M] = yn
        sq1_ref[:, b:b + 1] = jnp.sum(yn, axis=1, keepdims=True) * inv_m

    # channel attention, batched over B: squeeze (C1, B) -> fc1 -> ReLU -> fc2 -> sigmoid
    h1 = jnp.maximum(jnp.dot(fc11_ref[...], sq1_ref[...],
                             preferred_element_type=jnp.float32), 0.0)
    a1 = jax.nn.sigmoid(jnp.dot(fc12_ref[...], h1,
                                preferred_element_type=jnp.float32))  # (C1, B)

    # apply attention + fused neighbourhood max-pool over the nsample axis
    for b in range(B):
        ys = ys1_ref[:, b * M:(b + 1) * M] * a1[:, b:b + 1]
        ys1_ref[:, b * M:(b + 1) * M] = ys
        pooled = ys[:, 0:P]
        for s in range(1, S):
            pooled = jnp.maximum(pooled, ys[:, s * P:(s + 1) * P])
        p1_ref[:, b * P:(b + 1) * P] = pooled

    # ---- conv2: cat([pooled, fj]) @ W2  ==  W2a @ pooled + W2b @ fj (conv is linear) ----
    yb2 = jnp.dot(w2b_ref[...].astype(_MXU_DTYPE), ys1_ref[...].astype(_MXU_DTYPE),
                  preferred_element_type=jnp.float32)                 # (C2, B*M)
    ya2 = jnp.dot(w2a_ref[...].astype(_MXU_DTYPE), p1_ref[...].astype(_MXU_DTYPE),
                  preferred_element_type=jnp.float32)                 # (C2, B*P)
    C2 = yb2.shape[0]

    mx_list = []
    for b in range(B):
        ya_b = ya2[:, b * P:(b + 1) * P]
        # pass 1: single-pass InstanceNorm stats (blocks recomputed later, not cached)
        s1 = jnp.zeros((C2, 1), jnp.float32)
        s2 = jnp.zeros((C2, 1), jnp.float32)
        for s in range(S):
            blk = yb2[:, b * M + s * P:b * M + (s + 1) * P] + ya_b
            s1 = s1 + jnp.sum(blk, axis=1, keepdims=True)
            s2 = s2 + jnp.sum(blk * blk, axis=1, keepdims=True)
        mu = s1 * inv_m
        var = jnp.maximum(s2 * inv_m - mu * mu, 0.0)
        inv_std = jax.lax.rsqrt(var + 1e-5)
        # pass 2: recompute blk (one VPU add), normalize + ReLU, attn squeeze, running max
        sq = jnp.zeros((C2, 1), jnp.float32)
        mx = None
        for s in range(S):
            blk = yb2[:, b * M + s * P:b * M + (s + 1) * P] + ya_b
            z = jnp.maximum((blk - mu) * inv_std, 0.0)
            sq = sq + jnp.sum(z, axis=1, keepdims=True)
            mx = z if mx is None else jnp.maximum(mx, z)
        sq2_ref[:, b:b + 1] = sq * inv_m
        mx_list.append(mx)

    h2 = jnp.maximum(jnp.dot(fc21_ref[...], sq2_ref[...],
                             preferred_element_type=jnp.float32), 0.0)
    a2 = jax.nn.sigmoid(jnp.dot(fc22_ref[...], h2,
                                preferred_element_type=jnp.float32))  # (C2, B)
    # attention scale > 0, so it commutes with the max-pool
    for b in range(B):
        out_ref[:, b * P:(b + 1) * P] = (mx_list[b] * a2[:, b:b + 1]).astype(out_ref.dtype)


# ---------------------------------------------------------------------------
# Wrapper
# ---------------------------------------------------------------------------
# TODO(synk): for production point-cloud sizes (npoint*nsample >= 64K, Cout >= 256),
# tile the B*M axis over a grid with cross-tile InstanceNorm stat accumulation
# (pl.when init/finalize on a stats scratch), mark a Cout/P tile axis "parallel" for
# v7x dual-TC, and set vmem_limit_bytes — v7x only has 64 MiB VMEM and the default
# scoped limit is 32 MiB.  Unnecessary at these test shapes (per-stage VMEM < 100 KiB).
def ga_edgeconv_stage(feats, conv1, conv2):
    """feats: (B, Cf, nsample, npoint) grouped 'dp_df' features.
    Returns the stage output: pooled activation (B, C2, npoint)."""
    B, Cf, S, P = feats.shape
    C1 = conv1["w"].shape[0]
    C2 = conv2["wb"].shape[0]

    # fold batch into the lane axis (npoint minor) and pad Cin to a sublane multiple of 8
    x = jnp.transpose(feats, (1, 0, 2, 3)).reshape(Cf, B * S * P)
    cpad = -(-Cf // 8) * 8
    w1 = conv1["w"]
    if cpad != Cf:
        x = jnp.pad(x, ((0, cpad - Cf), (0, 0)))
        w1 = jnp.pad(w1, ((0, 0), (0, cpad - Cf)))

    vmem = pltpu.MemorySpace.VMEM
    out = pl.pallas_call(
        functools.partial(_ga_stage_kernel, batch=B, nsample=S),
        out_shape=jax.ShapeDtypeStruct((C2, B * P), jnp.float32),
        in_specs=[pl.BlockSpec(memory_space=vmem)] * 8,
        out_specs=pl.BlockSpec(memory_space=vmem),
        scratch_shapes=[pltpu.VMEM((C1, B * S * P), jnp.float32),   # conv1 activation
                        pltpu.VMEM((C1, B * P), jnp.float32),       # conv1 pooled
                        pltpu.VMEM((C1, B), jnp.float32),           # attn squeeze 1
                        pltpu.VMEM((C2, B), jnp.float32)],          # attn squeeze 2
    )(x, w1, conv1["fc1"], conv1["fc2"],
      conv2["wb"], conv2["wa"], conv2["fc1"], conv2["fc2"])
    return jnp.transpose(out.reshape(C2, B, P), (1, 0, 2))          # (B, C2, P)


# ---------------------------------------------------------------------------
# Plain-JAX glue: FPS sampling, ball-query grouping (data-dependent gathers)
# ---------------------------------------------------------------------------
# TODO(synk): FPS / ball-query are data-dependent gathers with no clean rectangular
# BlockSpec expression; left in plain JAX.
def furthest_point_sample(p, npoint):
    """p: (B, N, 3) -> int32 indices (B, npoint). Matches CUDA FPS (start @ 0)."""
    def single(pts):
        N = pts.shape[0]

        def body(i, state):
            idx, dists = state
            last = pts[idx[i - 1]]
            d = jnp.sum((pts - last) ** 2, axis=-1)
            dists = jnp.minimum(dists, d)
            idx = idx.at[i].set(jnp.argmax(dists).astype(jnp.int32))
            return idx, dists

        idx0 = jnp.zeros((npoint,), jnp.int32)
        d0 = jnp.full((N,), 1e10, jnp.float32)
        idx, _ = jax.lax.fori_loop(1, npoint, body, (idx0, d0))
        return idx

    return jax.vmap(single)(p)


def ball_query(radius, nsample, support, centers):
    """support (B,N,3), centers (B,M,3) -> idx (B,M,nsample) int32."""
    B, N, _ = support.shape
    d2 = jnp.sum((centers[:, :, None, :] - support[:, None, :, :]) ** 2, -1)
    mask = d2 < radius * radius
    ar = jnp.arange(N, dtype=jnp.int32)
    order = jnp.argsort(jnp.where(mask, ar, N + ar), axis=-1).astype(jnp.int32)
    idx = order[..., :nsample]
    cnt = jnp.sum(mask, axis=-1, keepdims=True)
    first = jnp.argmax(mask, axis=-1).astype(jnp.int32)
    k = jnp.arange(nsample)
    return jnp.where(k[None, None, :] < cnt, idx, first[..., None])


# ---------------------------------------------------------------------------
# pc_tokenizer forward (feature_type='dp_df', reduction='max')
# ---------------------------------------------------------------------------
def pc_tokenizer_forward(pc_params, p, f, *, scale, group_size, radius):
    """p: (B, N, 3), f: (B, C, N). Returns (out_p list, out_f list)."""
    B, N, _ = p.shape
    S = group_size
    out_p, out_f = [p], [f]
    for stage in pc_params:
        cur_p, cur_f = out_p[-1], out_f[-1]
        npoint = N // scale
        N = npoint

        idx = furthest_point_sample(cur_p, npoint)                       # (B, P)
        center_p = jnp.take_along_axis(
            cur_p, jnp.broadcast_to(idx[..., None], (B, npoint, 3)), axis=1)
        C = cur_f.shape[1]
        center_f = jnp.take_along_axis(
            cur_f, jnp.broadcast_to(idx[:, None, :], (B, C, npoint)), axis=2)

        gidx = ball_query(radius, S, cur_p, center_p)                    # (B, P, S)
        grouped_xyz = jax.vmap(lambda pp, ii: pp[ii])(cur_p, gidx)       # (B, P, S, 3)
        # lane-major layout: (B, C, S, P) with npoint (P) on the minor/lane axis
        dp = jnp.transpose(grouped_xyz - center_p[:, :, None, :], (0, 3, 2, 1))
        gidx_t = jnp.transpose(gidx, (0, 2, 1))                          # (B, S, P)
        fj = jax.vmap(lambda ff, ii: ff[:, ii])(cur_f, gidx_t)           # (B, C, S, P)
        df = fj - center_f[:, :, None, :]
        feats = jnp.concatenate([dp, df], axis=1)                        # (B, C+3, S, P)

        out_feat = ga_edgeconv_stage(feats, stage["conv1"], stage["conv2"])  # (B, ed, P)
        out_f.append(out_feat)
        out_p.append(center_p)
    return out_p, out_f


# ---------------------------------------------------------------------------
# Plain-JAX transformer / tokenizer / loss pieces of transfer_loss_shared_encoder
# ---------------------------------------------------------------------------
# TODO(synk): ViT blocks, cross-attention, LayerNorms and the correlation losses are
# standard dense ops left to XLA; a Pallas flash-attention only pays off at much
# longer sequence lengths than these token counts.
def layer_norm(x, g, b, eps=1e-6):
    mu = jnp.mean(x, axis=-1, keepdims=True)
    var = jnp.mean((x - mu) ** 2, axis=-1, keepdims=True)
    return (x - mu) * jax.lax.rsqrt(var + eps) * g + b


def img_tokenizer_forward(params, im, patch_size):
    """Conv2d(kernel=stride=patch) patch embed + flatten; norm_layer=None -> Identity."""
    B, C, H, W = im.shape
    gh, gw = H // patch_size, W // patch_size
    x = im.reshape(B, C, gh, patch_size, gw, patch_size)
    x = jnp.transpose(x, (0, 2, 4, 1, 3, 5)).reshape(B, gh * gw, C * patch_size * patch_size)
    w = params["im_proj_w"].reshape(params["im_proj_w"].shape[0], -1)
    return x @ w.T + params["im_proj_b"]                       # (B, num_patches, E)


def vit_block(x, prm, heads):
    B, Nt, E = x.shape
    hd = E // heads
    h = layer_norm(x, prm["ln1_g"], prm["ln1_b"])
    qkv = h @ prm["qkv_w"].T + prm["qkv_b"]
    qkv = jnp.transpose(qkv.reshape(B, Nt, 3, heads, hd), (2, 0, 3, 1, 4))
    q, k, v = qkv[0], qkv[1], qkv[2]
    attn = jax.nn.softmax(jnp.einsum("bhqd,bhkd->bhqk", q, k) / math.sqrt(hd), axis=-1)
    o = jnp.transpose(jnp.einsum("bhqk,bhkd->bhqd", attn, v), (0, 2, 1, 3)).reshape(B, Nt, E)
    x = x + (o @ prm["proj_w"].T + prm["proj_b"])
    h2 = layer_norm(x, prm["ln2_g"], prm["ln2_b"])
    h2 = jax.nn.gelu(h2 @ prm["fc1_w"].T + prm["fc1_b"], approximate=False)
    return x + (h2 @ prm["fc2_w"].T + prm["fc2_b"])


def multihead_attn(q_in, k_in, v_in, prm, heads):
    """nn.MultiheadAttention(batch_first=True) forward (no masks, no dropout)."""
    B, Nq, E = q_in.shape
    hd = E // heads
    w, b = prm["in_w"], prm["in_b"]
    q = q_in @ w[:E].T + b[:E]
    k = k_in @ w[E:2 * E].T + b[E:2 * E]
    v = v_in @ w[2 * E:].T + b[2 * E:]

    def split(t):
        return jnp.transpose(t.reshape(t.shape[0], t.shape[1], heads, hd), (0, 2, 1, 3))

    q, k, v = split(q), split(k), split(v)
    attn = jax.nn.softmax(jnp.einsum("bhqd,bhkd->bhqk", q, k) / math.sqrt(hd), axis=-1)
    o = jnp.transpose(jnp.einsum("bhqk,bhkd->bhqd", attn, v), (0, 2, 1, 3)).reshape(B, Nq, E)
    return o @ prm["out_w"].T + prm["out_b"]


def hierarchical_correlation_loss(im_features, pc_features, alpha=1.0, beta=1.0):
    def l2norm(x):
        return x / jnp.maximum(jnp.linalg.norm(x, axis=-1, keepdims=True), 1e-12)

    imf = l2norm(im_features)
    pcf = l2norm(pc_features)
    C = imf.shape[-1]
    global_corr = jnp.einsum("bnc,bnd->bcd", imf, pcf)
    global_loss = jnp.mean((global_corr - jnp.eye(C, dtype=imf.dtype)) ** 2)
    im_local = jnp.einsum("bik,bjk->bij", imf, imf)
    pc_local = jnp.einsum("bik,bjk->bij", pcf, pcf)
    local_loss = jnp.mean((im_local - pc_local) ** 2)
    return alpha * global_loss + beta * local_loss


def encoder_forward(params, pc, im, *, heads, depth, scale, group_size, radius,
                    patch_size, fuse_layer_num=1):
    p_list, x_list = pc_tokenizer_forward(
        params["pc"], pc, jnp.transpose(pc, (0, 2, 1)),
        scale=scale, group_size=group_size, radius=radius)
    cent_p = p_list[-1]
    pc_f = jnp.transpose(x_list[-1], (0, 2, 1)) @ params["proj_w"].T + params["proj_b"]
    im_f = img_tokenizer_forward(params, im, patch_size)

    pos = jax.nn.gelu(cent_p @ params["pos1_w"].T + params["pos1_b"], approximate=False)
    pos = pos @ params["pos2_w"].T + params["pos2_b"]

    pc_f_list, im_f_list = [], []
    for i in range(depth):
        pc_f = vit_block(pc_f + pos, params["blocks"][i], heads)
        im_f = vit_block(im_f, params["blocks"][i], heads)
        pc_f_list.append(pc_f)
        im_f_list.append(im_f)

    pc_f = layer_norm(pc_f, *params["pc_norm"])
    im_f = layer_norm(im_f, *params["im_norm"])
    x = multihead_attn(pc_f, im_f, pc_f, params["cross"], heads)
    y = multihead_attn(im_f, pc_f, im_f, params["cross"], heads)
    pc_f = layer_norm(pc_f + x, *params["cross_norm"])
    im_f = layer_norm(im_f + y, *params["cross_norm"])
    fused = jnp.concatenate([pc_f, im_f], axis=-1) @ params["fuse_w"].T + params["fuse_b"]

    style_loss = hierarchical_correlation_loss(im_f_list[-1], pc_f_list[-1], 1.0, 1.0)
    if fuse_layer_num == 0:
        loss = style_loss
    else:
        content = jnp.mean((pc_f_list[-1] - pc_f_list[-(fuse_layer_num + 1)]) ** 2)
        loss = style_loss + content
    return fused, im_f, cent_p, loss


# ---------------------------------------------------------------------------
# Deterministic synthetic parameters
# ---------------------------------------------------------------------------
def _normal(key, shape, scale):
    return scale * jax.random.normal(key, shape, jnp.float32)


def init_pc_params(key, in_channels, embed_dim, stages, reduction=4):
    params = []
    ed = int(embed_dim // (2 ** (stages - 1)))
    cin = in_channels
    for _ in range(stages):
        key, k1, k2, k3, k4, k5, k6 = jax.random.split(key, 7)
        mid = max(ed // reduction, 1)
        conv1 = dict(w=_normal(k1, (ed, cin + 3), 0.2),          # 'dp_df': C -> C + 3
                     fc1=_normal(k2, (mid, ed), 0.2),
                     fc2=_normal(k3, (ed, mid), 0.2))
        w2 = _normal(k4, (ed, 2 * ed), 0.2)                      # concat order [pooled, fj]
        conv2 = dict(wa=w2[:, :ed], wb=w2[:, ed:],
                     fc1=_normal(k5, (mid, ed), 0.2),
                     fc2=_normal(k6, (ed, mid), 0.2))
        params.append(dict(conv1=conv1, conv2=conv2))
        cin = ed
        ed *= 2
    return params


def init_encoder_params(key, *, embed_dim, heads, depth, patch_size, in_chans,
                        pc_h_hidden_dim, stages, mlp_ratio=4, pos_hidden=128):
    E = embed_dim
    keys = iter(jax.random.split(key, 16 + 12 * depth))
    nk = lambda: next(keys)
    p = {}
    p["pc"] = init_pc_params(nk(), in_chans, pc_h_hidden_dim, stages)
    p["im_proj_w"] = _normal(nk(), (E, in_chans, patch_size, patch_size), 0.1)
    p["im_proj_b"] = jnp.zeros((E,), jnp.float32)
    p["proj_w"] = _normal(nk(), (E, pc_h_hidden_dim), 0.1)
    p["proj_b"] = jnp.zeros((E,), jnp.float32)
    p["pos1_w"] = _normal(nk(), (pos_hidden, 3), 0.1)
    p["pos1_b"] = jnp.zeros((pos_hidden,), jnp.float32)
    p["pos2_w"] = _normal(nk(), (E, pos_hidden), 0.1)
    p["pos2_b"] = jnp.zeros((E,), jnp.float32)
    H = int(mlp_ratio * E)
    blocks = []
    for _ in range(depth):
        blocks.append(dict(
            ln1_g=jnp.ones((E,), jnp.float32), ln1_b=jnp.zeros((E,), jnp.float32),
            qkv_w=_normal(nk(), (3 * E, E), 0.1), qkv_b=jnp.zeros((3 * E,), jnp.float32),
            proj_w=_normal(nk(), (E, E), 0.1), proj_b=jnp.zeros((E,), jnp.float32),
            ln2_g=jnp.ones((E,), jnp.float32), ln2_b=jnp.zeros((E,), jnp.float32),
            fc1_w=_normal(nk(), (H, E), 0.1), fc1_b=jnp.zeros((H,), jnp.float32),
            fc2_w=_normal(nk(), (E, H), 0.1), fc2_b=jnp.zeros((E,), jnp.float32)))
    p["blocks"] = blocks
    p["pc_norm"] = (jnp.ones((E,), jnp.float32), jnp.zeros((E,), jnp.float32))
    p["im_norm"] = (jnp.ones((E,), jnp.float32), jnp.zeros((E,), jnp.float32))
    p["cross"] = dict(in_w=_normal(nk(), (3 * E, E), 0.1),
                      in_b=jnp.zeros((3 * E,), jnp.float32),
                      out_w=_normal(nk(), (E, E), 0.1),
                      out_b=jnp.zeros((E,), jnp.float32))
    p["cross_norm"] = (jnp.ones((E,), jnp.float32), jnp.zeros((E,), jnp.float32))
    p["fuse_w"] = _normal(nk(), (E, 2 * E), 0.1)
    p["fuse_b"] = jnp.zeros((E,), jnp.float32)
    return p


# ---------------------------------------------------------------------------
if __name__ == "__main__":
    # small-shape configuration consistent with the module
    B = 2
    N = 64                              # points per cloud
    E, heads, depth = 32, 4, 2          # transformer width / heads / depth
    patch_size, img_h, img_w = 4, 8, 16 # -> 2*4 = 8 image patches
    sample_ratio, scale, group_size, radius = 0.125, 2, 8, 0.2
    pc_h_hidden_dim = 32
    stages = int(round(math.log(1.0 / sample_ratio, scale)))   # = 3 -> final npoint = 8

    key = jax.random.PRNGKey(0)
    k_pc, k_im, k_par = jax.random.split(key, 3)
    pc = jax.random.uniform(k_pc, (B, N, 3), dtype=jnp.float32)
    im = jax.random.uniform(k_im, (B, 3, img_h, img_w), dtype=jnp.float32)

    params = init_encoder_params(
        k_par, embed_dim=E, heads=heads, depth=depth, patch_size=patch_size,
        in_chans=3, pc_h_hidden_dim=pc_h_hidden_dim, stages=stages)

    fused, im_f, cent_p, loss = encoder_forward(
        params, pc, im, heads=heads, depth=depth, scale=scale,
        group_size=group_size, radius=radius, patch_size=patch_size,
        fuse_layer_num=1)

    jax.block_until_ready((fused, im_f, cent_p, loss))

    n_final = N // (scale ** stages)                            # 8 pc tokens
    n_patches = (img_h // patch_size) * (img_w // patch_size)   # 8 image tokens
    assert fused.shape == (B, n_final, E)
    assert im_f.shape == (B, n_patches, E)
    assert cent_p.shape == (B, n_final, 3)
    assert loss.shape == ()
    assert bool(jnp.isfinite(loss))
    print("KERNEL_OK")
</pallas_src>

<mosaic_0001>
module attributes {stable_mosaic.version = 11 : i64} {
  func.func @_ga_stage_kernel(%arg0: memref<8x512xf32, #tpu.memory_space<vmem>>, %arg1: memref<8x8xf32, #tpu.memory_space<vmem>>, %arg2: memref<2x8xf32, #tpu.memory_space<vmem>>, %arg3: memref<8x2xf32, #tpu.memory_space<vmem>>, %arg4: memref<8x8xf32, #tpu.memory_space<vmem>>, %arg5: memref<8x8xf32, #tpu.memory_space<vmem>>, %arg6: memref<2x8xf32, #tpu.memory_space<vmem>>, %arg7: memref<8x2xf32, #tpu.memory_space<vmem>>, %arg8: memref<8x64xf32, #tpu.memory_space<vmem>>, %arg9: memref<8x512xf32, #tpu.memory_space<vmem>>, %arg10: memref<8x64xf32, #tpu.memory_space<vmem>>, %arg11: memref<8x2xf32, #tpu.memory_space<vmem>>, %arg12: memref<8x2xf32, #tpu.memory_space<vmem>>) attributes {dimension_semantics = [], scalar_prefetch = 0 : i64, scratch_operands = 4 : i64, tpu.core_type = #tpu.core_type<tc>} {
    %c0 = arith.constant 0 : index
    %c0_0 = arith.constant 0 : index
    %0 = vector.load %arg0[%c0, %c0_0] : memref<8x512xf32, #tpu.memory_space<vmem>>, vector<8x512xf32>
    %c0_1 = arith.constant 0 : index
    %c0_2 = arith.constant 0 : index
    %1 = vector.load %arg1[%c0_1, %c0_2] : memref<8x8xf32, #tpu.memory_space<vmem>>, vector<8x8xf32>
    %cst = arith.constant dense<0.000000e+00> : vector<8x512xf32>
    %2 = tpu.matmul %1, %0, %cst {dimension_numbers = #tpu.dot_dimension_numbers<[1], [0], [0], [1], [0, 0, 1, 1], [], []>} : vector<8x8xf32>, vector<8x512xf32>, vector<8x512xf32> -> vector<8x512xf32>
    %3 = vector.extract_strided_slice %2 {offsets = [0, 0], sizes = [8, 256], strides = [1, 1]} : vector<8x512xf32> to vector<8x256xf32>
    %cst_3 = arith.constant dense<0.000000e+00> : vector<8xf32>
    %4 = vector.multi_reduction <add>, %3, %cst_3 [1] : vector<8x256xf32> to vector<8xf32>
    %5 = vector.shape_cast %4 : vector<8xf32> to vector<8x1xf32>
    %cst_4 = arith.constant 3.906250e-03 : f32
    %6 = vector.broadcast %cst_4 : f32 to vector<8x1xf32>
    %7 = arith.mulf %5, %6 : vector<8x1xf32>
    %8 = arith.mulf %3, %3 : vector<8x256xf32>
    %cst_5 = arith.constant dense<0.000000e+00> : vector<8xf32>
    %9 = vector.multi_reduction <add>, %8, %cst_5 [1] : vector<8x256xf32> to vector<8xf32>
    %10 = vector.shape_cast %9 : vector<8xf32> to vector<8x1xf32>
    %cst_6 = arith.constant 3.906250e-03 : f32
    %11 = vector.broadcast %cst_6 : f32 to vector<8x1xf32>
    %12 = arith.mulf %10, %11 : vector<8x1xf32>
    %13 = arith.mulf %7, %7 : vector<8x1xf32>
    %14 = arith.subf %12, %13 : vector<8x1xf32>
    %cst_7 = arith.constant 0.000000e+00 : f32
    %15 = vector.broadcast %cst_7 : f32 to vector<8x1xf32>
    %16 = arith.maximumf %14, %15 : vector<8x1xf32>
    %17 = vector.broadcast %7 : vector<8x1xf32> to vector<8x256xf32>
    %18 = arith.subf %3, %17 : vector<8x256xf32>
    %cst_8 = arith.constant 9.99999974E-6 : f32
    %19 = vector.broadcast %cst_8 : f32 to vector<8x1xf32>
    %20 = arith.addf %16, %19 : vector<8x1xf32>
    %21 = math.rsqrt %20 : vector<8x1xf32>
    %22 = vector.broadcast %21 : vector<8x1xf32> to vector<8x256xf32>
    %23 = arith.mulf %18, %22 : vector<8x256xf32>
    %cst_9 = arith.constant 0.000000e+00 : f32
    %24 = vector.broadcast %cst_9 : f32 to vector<8x256xf32>
    %25 = arith.maximumf %23, %24 : vector<8x256xf32>
    %c0_10 = arith.constant 0 : index
    %c0_11 = arith.constant 0 : index
    %26 = vector.load %arg9[%c0_10, %c0_11] : memref<8x512xf32, #tpu.memory_space<vmem>>, vector<8x256xf32>
    tpu.vector_store %arg9[%c0_10, %c0_11], %25 {strides = array<i32>} : memref<8x512xf32, #tpu.memory_space<vmem>>, vector<8x256xf32>,
    %cst_12 = arith.constant dense<0.000000e+00> : vector<8xf32>
    %27 = vector.multi_reduction <add>, %25, %cst_12 [1] : vector<8x256xf32> to vector<8xf32>
    %28 = vector.shape_cast %27 : vector<8xf32> to vector<8x1xf32>
    %cst_13 = arith.constant 3.906250e-03 : f32
    %29 = vector.broadcast %cst_13 : f32 to vector<8x1xf32>
    %30 = arith.mulf %28, %29 : vector<8x1xf32>
    %c0_14 = arith.constant 0 : index
    %c0_15 = arith.constant 0 : index
    %31 = vector.load %arg11[%c0_14, %c0_15] : memref<8x2xf32, #tpu.memory_space<vmem>>, vector<8x1xf32>
    tpu.vector_store %arg11[%c0_14, %c0_15], %30 {strides = array<i32>} : memref<8x2xf32, #tpu.memory_space<vmem>>, vector<8x1xf32>,
    %32 = vector.extract_strided_slice %2 {offsets = [0, 256], sizes = [8, 256], strides = [1, 1]} : vector<8x512xf32> to vector<8x256xf32>
    %cst_16 = arith.constant dense<0.000000e+00> : vector<8xf32>
    %33 = vector.multi_reduction <add>, %32, %cst_16 [1] : vector<8x256xf32> to vector<8xf32>
    %34 = vector.shape_cast %33 : vector<8xf32> to vector<8x1xf32>
    %cst_17 = arith.constant 3.906250e-03 : f32
    %35 = vector.broadcast %cst_17 : f32 to vector<8x1xf32>
    %36 = arith.mulf %34, %35 : vector<8x1xf32>
    %37 = arith.mulf %32, %32 : vector<8x256xf32>
    %cst_18 = arith.constant dense<0.000000e+00> : vector<8xf32>
    %38 = vector.multi_reduction <add>, %37, %cst_18 [1] : vector<8x256xf32> to vector<8xf32>
    %39 = vector.shape_cast %38 : vector<8xf32> to vector<8x1xf32>
    %cst_19 = arith.constant 3.906250e-03 : f32
    %40 = vector.broadcast %cst_19 : f32 to vector<8x1xf32>
    %41 = arith.mulf %39, %40 : vector<8x1xf32>
    %42 = arith.mulf %36, %36 : vector<8x1xf32>
    %43 = arith.subf %41, %42 : vector<8x1xf32>
    %cst_20 = arith.constant 0.000000e+00 : f32
    %44 = vector.broadcast %cst_20 : f32 to vector<8x1xf32>
    %45 = arith.maximumf %43, %44 : vector<8x1xf32>
    %46 = vector.broadcast %36 : vector<8x1xf32> to vector<8x256xf32>
    %47 = arith.subf %32, %46 : vector<8x256xf32>
    %cst_21 = arith.constant 9.99999974E-6 : f32
    %48 = vector.broadcast %cst_21 : f32 to vector<8x1xf32>
    %49 = arith.addf %45, %48 : vector<8x1xf32>
    %50 = math.rsqrt %49 : vector<8x1xf32>
    %51 = vector.broadcast %50 : vector<8x1xf32> to vector<8x256xf32>
    %52 = arith.mulf %47, %51 : vector<8x256xf32>
    %cst_22 = arith.constant 0.000000e+00 : f32
    %53 = vector.broadcast %cst_22 : f32 to vector<8x256xf32>
    %54 = arith.maximumf %52, %53 : vector<8x256xf32>
    %c0_23 = arith.constant 0 : index
    %c256 = arith.constant 256 : index
    %55 = vector.load %arg9[%c0_23, %c256] : memref<8x512xf32, #tpu.memory_space<vmem>>, vector<8x256xf32>
    tpu.vector_store %arg9[%c0_23, %c256], %54 {strides = array<i32>} : memref<8x512xf32, #tpu.memory_space<vmem>>, vector<8x256xf32>,
    %cst_24 = arith.constant dense<0.000000e+00> : vector<8xf32>
    %56 = vector.multi_reduction <add>, %54, %cst_24 [1] : vector<8x256xf32> to vector<8xf32>
    %57 = vector.shape_cast %56 : vector<8xf32> to vector<8x1xf32>
    %cst_25 = arith.constant 3.906250e-03 : f32
    %58 = vector.broadcast %cst_25 : f32 to vector<8x1xf32>
    %59 = arith.mulf %57, %58 : vector<8x1xf32>
    %c0_26 = arith.constant 0 : index
    %c1 = arith.constant 1 : index
    %60 = vector.load %arg11[%c0_26, %c1] : memref<8x2xf32, #tpu.memory_space<vmem>>, vector<8x1xf32>
    tpu.vector_store %arg11[%c0_26, %c1], %59 {strides = array<i32>} : memref<8x2xf32, #tpu.memory_space<vmem>>, vector<8x1xf32>,
    %c0_27 = arith.constant 0 : index
    %c0_28 = arith.constant 0 : index
    %61 = vector.load %arg2[%c0_27, %c0_28] : memref<2x8xf32, #tpu.memory_space<vmem>>, vector<2x8xf32>
    %c0_29 = arith.constant 0 : index
    %c0_30 = arith.constant 0 : index
    %62 = vector.load %arg11[%c0_29, %c0_30] : memref<8x2xf32, #tpu.memory_space<vmem>>, vector<8x2xf32>
    %cst_31 = arith.constant dense<0.000000e+00> : vector<2x2xf32>
    %63 = tpu.matmul %61, %62, %cst_31 {dimension_numbers = #tpu.dot_dimension_numbers<[1], [0], [0], [1], [0, 0, 1, 1], [], []>} : vector<2x8xf32>, vector<8x2xf32>, vector<2x2xf32> -> vector<2x2xf32>
    %cst_32 = arith.constant 0.000000e+00 : f32
    %64 = vector.broadcast %cst_32 : f32 to vector<2x2xf32>
    %65 = arith.maximumf %63, %64 : vector<2x2xf32>
    %c0_33 = arith.constant 0 : index
    %c0_34 = arith.constant 0 : index
    %66 = vector.load %arg3[%c0_33, %c0_34] : memref<8x2xf32, #tpu.memory_space<vmem>>, vector<8x2xf32>
    %cst_35 = arith.constant dense<0.000000e+00> : vector<8x2xf32>
    %67 = tpu.matmul %66, %65, %cst_35 {dimension_numbers = #tpu.dot_dimension_numbers<[1], [0], [0], [1], [0, 0, 1, 1], [], []>} : vector<8x2xf32>, vector<2x2xf32>, vector<8x2xf32> -> vector<8x2xf32>
    %68 = arith.negf %67 : vector<8x2xf32>
    %69 = math.exp %68 : vector<8x2xf32>
    %cst_36 = arith.constant 1.000000e+00 : f32
    %70 = vector.broadcast %cst_36 : f32 to vector<8x2xf32>
    %71 = arith.addf %70, %69 : vector<8x2xf32>
    %72 = arith.divf %70, %71 : vector<8x2xf32>
    %c0_37 = arith.constant 0 : index
    %c0_38 = arith.constant 0 : index
    %73 = vector.load %arg9[%c0_37, %c0_38] : memref<8x512xf32, #tpu.memory_space<vmem>>, vector<8x256xf32>
    %74 = vector.extract_strided_slice %72 {offsets = [0, 0], sizes = [8, 1], strides = [1, 1]} : vector<8x2xf32> to vector<8x1xf32>
    %75 = vector.broadcast %74 : vector<8x1xf32> to vector<8x256xf32>
    %76 = arith.mulf %73, %75 : vector<8x256xf32>
    %c0_39 = arith.constant 0 : index
    %c0_40 = arith.constant 0 : index
    %77 = vector.load %arg9[%c0_39, %c0_40] : memref<8x512xf32, #tpu.memory_space<vmem>>, vector<8x256xf32>
    tpu.vector_store %arg9[%c0_39, %c0_40], %76 {strides = array<i32>} : memref<8x512xf32, #tpu.memory_space<vmem>>, vector<8x256xf32>,
    %78 = vector.extract_strided_slice %76 {offsets = [0, 0], sizes = [8, 32], strides = [1, 1]} : vector<8x256xf32> to vector<8x32xf32>
    %79 = vector.extract_strided_slice %76 {offsets = [0, 32], sizes = [8, 32], strides = [1, 1]} : vector<8x256xf32> to vector<8x32xf32>
    %80 = arith.maximumf %78, %79 : vector<8x32xf32>
    %81 = vector.extract_strided_slice %76 {offsets = [0, 64], sizes = [8, 32], strides = [1, 1]} : vector<8x256xf32> to vector<8x32xf32>
    %82 = arith.maximumf %80, %81 : vector<8x32xf32>
    %83 = vector.extract_strided_slice %76 {offsets = [0, 96], sizes = [8, 32], strides = [1, 1]} : vector<8x256xf32> to vector<8x32xf32>
    %84 = arith.maximumf %82, %83 : vector<8x32xf32>
    %85 = vector.extract_strided_slice %76 {offsets = [0, 128], sizes = [8, 32], strides = [1, 1]} : vector<8x256xf32> to vector<8x32xf32>
    %86 = arith.maximumf %84, %85 : vector<8x32xf32>
    %87 = vector.extract_strided_slice %76 {offsets = [0, 160], sizes = [8, 32], strides = [1, 1]} : vector<8x256xf32> to vector<8x32xf32>
    %88 = arith.maximumf %86, %87 : vector<8x32xf32>
    %89 = vector.extract_strided_slice %76 {offsets = [0, 192], sizes = [8, 32], strides = [1, 1]} : vector<8x256xf32> to vector<8x32xf32>
    %90 = arith.maximumf %88, %89 : vector<8x32xf32>
    %91 = vector.extract_strided_slice %76 {offsets = [0, 224], sizes = [8, 32], strides = [1, 1]} : vector<8x256xf32> to vector<8x32xf32>
    %92 = arith.maximumf %90, %91 : vector<8x32xf32>
    %c0_41 = arith.constant 0 : index
    %c0_42 = arith.constant 0 : index
    %93 = vector.load %arg10[%c0_41, %c0_42] : memref<8x64xf32, #tpu.memory_space<vmem>>, vector<8x32xf32>
    tpu.vector_store %arg10[%c0_41, %c0_42], %92 {strides = array<i32>} : memref<8x64xf32, #tpu.memory_space<vmem>>, vector<8x32xf32>,
    %c0_43 = arith.constant 0 : index
    %c256_44 = arith.constant 256 : index
    %94 = vector.load %arg9[%c0_43, %c256_44] : memref<8x512xf32, #tpu.memory_space<vmem>>, vector<8x256xf32>
    %95 = vector.extract_strided_slice %72 {offsets = [0, 1], sizes = [8, 1], strides = [1, 1]} : vector<8x2xf32> to vector<8x1xf32>
    %96 = vector.broadcast %95 : vector<8x1xf32> to vector<8x256xf32>
    %97 = arith.mulf %94, %96 : vector<8x256xf32>
    %c0_45 = arith.constant 0 : index
    %c256_46 = arith.constant 256 : index
    %98 = vector.load %arg9[%c0_45, %c256_46] : memref<8x512xf32, #tpu.memory_space<vmem>>, vector<8x256xf32>
    tpu.vector_store %arg9[%c0_45, %c256_46], %97 {strides = array<i32>} : memref<8x512xf32, #tpu.memory_space<vmem>>, vector<8x256xf32>,
    %99 = vector.extract_strided_slice %97 {offsets = [0, 0], sizes = [8, 32], strides = [1, 1]} : vector<8x256xf32> to vector<8x32xf32>
    %100 = vector.extract_strided_slice %97 {offsets = [0, 32], sizes = [8, 32], strides = [1, 1]} : vector<8x256xf32> to vector<8x32xf32>
    %101 = arith.maximumf %99, %100 : vector<8x32xf32>
    %102 = vector.extract_strided_slice %97 {offsets = [0, 64], sizes = [8, 32], strides = [1, 1]} : vector<8x256xf32> to vector<8x32xf32>
    %103 = arith.maximumf %101, %102 : vector<8x32xf32>
    %104 = vector.extract_strided_slice %97 {offsets = [0, 96], sizes = [8, 32], strides = [1, 1]} : vector<8x256xf32> to vector<8x32xf32>
    %105 = arith.maximumf %103, %104 : vector<8x32xf32>
    %106 = vector.extract_strided_slice %97 {offsets = [0, 128], sizes = [8, 32], strides = [1, 1]} : vector<8x256xf32> to vector<8x32xf32>
    %107 = arith.maximumf %105, %106 : vector<8x32xf32>
    %108 = vector.extract_strided_slice %97 {offsets = [0, 160], sizes = [8, 32], strides = [1, 1]} : vector<8x256xf32> to vector<8x32xf32>
    %109 = arith.maximumf %107, %108 : vector<8x32xf32>
    %110 = vector.extract_strided_slice %97 {offsets = [0, 192], sizes = [8, 32], strides = [1, 1]} : vector<8x256xf32> to vector<8x32xf32>
    %111 = arith.maximumf %109, %110 : vector<8x32xf32>
    %112 = vector.extract_strided_slice %97 {offsets = [0, 224], sizes = [8, 32], strides = [1, 1]} : vector<8x256xf32> to vector<8x32xf32>
    %113 = arith.maximumf %111, %112 : vector<8x32xf32>
    %c0_47 = arith.constant 0 : index
    %c32 = arith.constant 32 : index
    %114 = vector.load %arg10[%c0_47, %c32] : memref<8x64xf32, #tpu.memory_space<vmem>>, vector<8x32xf32>
    tpu.vector_store %arg10[%c0_47, %c32], %113 {strides = array<i32>} : memref<8x64xf32, #tpu.memory_space<vmem>>, vector<8x32xf32>,
    %c0_48 = arith.constant 0 : index
    %c0_49 = arith.constant 0 : index
    %115 = vector.load %arg4[%c0_48, %c0_49] : memref<8x8xf32, #tpu.memory_space<vmem>>, vector<8x8xf32>
    %c0_50 = arith.constant 0 : index
    %c0_51 = arith.constant 0 : index
    %116 = vector.load %arg9[%c0_50, %c0_51] : memref<8x512xf32, #tpu.memory_space<vmem>>, vector<8x512xf32>
    %cst_52 = arith.constant dense<0.000000e+00> : vector<8x512xf32>
    %117 = tpu.matmul %115, %116, %cst_52 {dimension_numbers = #tpu.dot_dimension_numbers<[1], [0], [0], [1], [0, 0, 1, 1], [], []>} : vector<8x8xf32>, vector<8x512xf32>, vector<8x512xf32> -> vector<8x512xf32>
    %c0_53 = arith.constant 0 : index
    %c0_54 = arith.constant 0 : index
    %118 = vector.load %arg5[%c0_53, %c0_54] : memref<8x8xf32, #tpu.memory_space<vmem>>, vector<8x8xf32>
    %c0_55 = arith.constant 0 : index
    %c0_56 = arith.constant 0 : index
    %119 = vector.load %arg10[%c0_55, %c0_56] : memref<8x64xf32, #tpu.memory_space<vmem>>, vector<8x64xf32>
    %cst_57 = arith.constant dense<0.000000e+00> : vector<8x64xf32>
    %120 = tpu.matmul %118, %119, %cst_57 {dimension_numbers = #tpu.dot_dimension_numbers<[1], [0], [0], [1], [0, 0, 1, 1], [], []>} : vector<8x8xf32>, vector<8x64xf32>, vector<8x64xf32> -> vector<8x64xf32>
    %121 = vector.extract_strided_slice %120 {offsets = [0, 0], sizes = [8, 32], strides = [1, 1]} : vector<8x64xf32> to vector<8x32xf32>
    %cst_58 = arith.constant 0.000000e+00 : f32
    %122 = vector.broadcast %cst_58 : f32 to vector<8x1xf32>
    %cst_59 = arith.constant 0.000000e+00 : f32
    %123 = vector.broadcast %cst_59 : f32 to vector<8x1xf32>
    %124 = vector.extract_strided_slice %117 {offsets = [0, 0], sizes = [8, 32], strides = [1, 1]} : vector<8x512xf32> to vector<8x32xf32>
    %125 = arith.addf %124, %121 : vector<8x32xf32>
    %cst_60 = arith.constant dense<0.000000e+00> : vector<8xf32>
    %126 = vector.multi_reduction <add>, %125, %cst_60 [1] : vector<8x32xf32> to vector<8xf32>
    %127 = vector.shape_cast %126 : vector<8xf32> to vector<8x1xf32>
    %128 = arith.addf %122, %127 : vector<8x1xf32>
    %129 = arith.mulf %125, %125 : vector<8x32xf32>
    %cst_61 = arith.constant dense<0.000000e+00> : vector<8xf32>
    %130 = vector.multi_reduction <add>, %129, %cst_61 [1] : vector<8x32xf32> to vector<8xf32>
    %131 = vector.shape_cast %130 : vector<8xf32> to vector<8x1xf32>
    %132 = arith.addf %123, %131 : vector<8x1xf32>
    %133 = vector.extract_strided_slice %117 {offsets = [0, 32], sizes = [8, 32], strides = [1, 1]} : vector<8x512xf32> to vector<8x32xf32>
    %134 = arith.addf %133, %121 : vector<8x32xf32>
    %cst_62 = arith.constant dense<0.000000e+00> : vector<8xf32>
    %135 = vector.multi_reduction <add>, %134, %cst_62 [1] : vector<8x32xf32> to vector<8xf32>
    %136 = vector.shape_cast %135 : vector<8xf32> to vector<8x1xf32>
    %137 = arith.addf %128, %136 : vector<8x1xf32>
    %138 = arith.mulf %134, %134 : vector<8x32xf32>
    %cst_63 = arith.constant dense<0.000000e+00> : vector<8xf32>
    %139 = vector.multi_reduction <add>, %138, %cst_63 [1] : vector<8x32xf32> to vector<8xf32>
    %140 = vector.shape_cast %139 : vector<8xf32> to vector<8x1xf32>
    %141 = arith.addf %132, %140 : vector<8x1xf32>
    %142 = vector.extract_strided_slice %117 {offsets = [0, 64], sizes = [8, 32], strides = [1, 1]} : vector<8x512xf32> to vector<8x32xf32>
    %143 = arith.addf %142, %121 : vector<8x32xf32>
    %cst_64 = arith.constant dense<0.000000e+00> : vector<8xf32>
    %144 = vector.multi_reduction <add>, %143, %cst_64 [1] : vector<8x32xf32> to vector<8xf32>
    %145 = vector.shape_cast %144 : vector<8xf32> to vector<8x1xf32>
    %146 = arith.addf %137, %145 : vector<8x1xf32>
    %147 = arith.mulf %143, %143 : vector<8x32xf32>
    %cst_65 = arith.constant dense<0.000000e+00> : vector<8xf32>
    %148 = vector.multi_reduction <add>, %147, %cst_65 [1] : vector<8x32xf32> to vector<8xf32>
    %149 = vector.shape_cast %148 : vector<8xf32> to vector<8x1xf32>
    %150 = arith.addf %141, %149 : vector<8x1xf32>
    %151 = vector.extract_strided_slice %117 {offsets = [0, 96], sizes = [8, 32], strides = [1, 1]} : vector<8x512xf32> to vector<8x32xf32>
    %152 = arith.addf %151, %121 : vector<8x32xf32>
    %cst_66 = arith.constant dense<0.000000e+00> : vector<8xf32>
    %153 = vector.multi_reduction <add>, %152, %cst_66 [1] : vector<8x32xf32> to vector<8xf32>
    %154 = vector.shape_cast %153 : vector<8xf32> to vector<8x1xf32>
    %155 = arith.addf %146, %154 : vector<8x1xf32>
    %156 = arith.mulf %152, %152 : vector<8x32xf32>
    %cst_67 = arith.constant dense<0.000000e+00> : vector<8xf32>
    %157 = vector.multi_reduction <add>, %156, %cst_67 [1] : vector<8x32xf32> to vector<8xf32>
    %158 = vector.shape_cast %157 : vector<8xf32> to vector<8x1xf32>
    %159 = arith.addf %150, %158 : vector<8x1xf32>
    %160 = vector.extract_strided_slice %117 {offsets = [0, 128], sizes = [8, 32], strides = [1, 1]} : vector<8x512xf32> to vector<8x32xf32>
    %161 = arith.addf %160, %121 : vector<8x32xf32>
    %cst_68 = arith.constant dense<0.000000e+00> : vector<8xf32>
    %162 = vector.multi_reduction <add>, %161, %cst_68 [1] : vector<8x32xf32> to vector<8xf32>
    %163 = vector.shape_cast %162 : vector<8xf32> to vector<8x1xf32>
    %164 = arith.addf %155, %163 : vector<8x1xf32>
    %165 = arith.mulf %161, %161 : vector<8x32xf32>
    %cst_69 = arith.constant dense<0.000000e+00> : vector<8xf32>
    %166 = vector.multi_reduction <add>, %165, %cst_69 [1] : vector<8x32xf32> to vector<8xf32>
    %167 = vector.shape_cast %166 : vector<8xf32> to vector<8x1xf32>
    %168 = arith.addf %159, %167 : vector<8x1xf32>
    %169 = vector.extract_strided_slice %117 {offsets = [0, 160], sizes = [8, 32], strides = [1, 1]} : vector<8x512xf32> to vector<8x32xf32>
    %170 = arith.addf %169, %121 : vector<8x32xf32>
    %cst_70 = arith.constant dense<0.000000e+00> : vector<8xf32>
    %171 = vector.multi_reduction <add>, %170, %cst_70 [1] : vector<8x32xf32> to vector<8xf32>
    %172 = vector.shape_cast %171 : vector<8xf32> to vector<8x1xf32>
    %173 = arith.addf %164, %172 : vector<8x1xf32>
    %174 = arith.mulf %170, %170 : vector<8x32xf32>
    %cst_71 = arith.constant dense<0.000000e+00> : vector<8xf32>
    %175 = vector.multi_reduction <add>, %174, %cst_71 [1] : vector<8x32xf32> to vector<8xf32>
    %176 = vector.shape_cast %175 : vector<8xf32> to vector<8x1xf32>
    %177 = arith.addf %168, %176 : vector<8x1xf32>
    %178 = vector.extract_strided_slice %117 {offsets = [0, 192], sizes = [8, 32], strides = [1, 1]} : vector<8x512xf32> to vector<8x32xf32>
    %179 = arith.addf %178, %121 : vector<8x32xf32>
    %cst_72 = arith.constant dense<0.000000e+00> : vector<8xf32>
    %180 = vector.multi_reduction <add>, %179, %cst_72 [1] : vector<8x32xf32> to vector<8xf32>
    %181 = vector.shape_cast %180 : vector<8xf32> to vector<8x1xf32>
    %182 = arith.addf %173, %181 : vector<8x1xf32>
    %183 = arith.mulf %179, %179 : vector<8x32xf32>
    %cst_73 = arith.constant dense<0.000000e+00> : vector<8xf32>
    %184 = vector.multi_reduction <add>, %183, %cst_73 [1] : vector<8x32xf32> to vector<8xf32>
    %185 = vector.shape_cast %184 : vector<8xf32> to vector<8x1xf32>
    %186 = arith.addf %177, %185 : vector<8x1xf32>
    %187 = vector.extract_strided_slice %117 {offsets = [0, 224], sizes = [8, 32], strides = [1, 1]} : vector<8x512xf32> to vector<8x32xf32>
    %188 = arith.addf %187, %121 : vector<8x32xf32>
    %cst_74 = arith.constant dense<0.000000e+00> : vector<8xf32>
    %189 = vector.multi_reduction <add>, %188, %cst_74 [1] : vector<8x32xf32> to vector<8xf32>
    %190 = vector.shape_cast %189 : vector<8xf32> to vector<8x1xf32>
    %191 = arith.addf %182, %190 : vector<8x1xf32>
    %192 = arith.mulf %188, %188 : vector<8x32xf32>
    %cst_75 = arith.constant dense<0.000000e+00> : vector<8xf32>
    %193 = vector.multi_reduction <add>, %192, %cst_75 [1] : vector<8x32xf32> to vector<8xf32>
    %194 = vector.shape_cast %193 : vector<8xf32> to vector<8x1xf32>
    %195 = arith.addf %186, %194 : vector<8x1xf32>
    %cst_76 = arith.constant 3.906250e-03 : f32
    %196 = vector.broadcast %cst_76 : f32 to vector<8x1xf32>
    %197 = arith.mulf %191, %196 : vector<8x1xf32>
    %cst_77 = arith.constant 3.906250e-03 : f32
    %198 = vector.broadcast %cst_77 : f32 to vector<8x1xf32>
    %199 = arith.mulf %195, %198 : vector<8x1xf32>
    %200 = arith.mulf %197, %197 : vector<8x1xf32>
    %201 = arith.subf %199, %200 : vector<8x1xf32>
    %cst_78 = arith.constant 0.000000e+00 : f32
    %202 = vector.broadcast %cst_78 : f32 to vector<8x1xf32>
    %203 = arith.maximumf %201, %202 : vector<8x1xf32>
    %cst_79 = arith.constant 9.99999974E-6 : f32
    %204 = vector.broadcast %cst_79 : f32 to vector<8x1xf32>
    %205 = arith.addf %203, %204 : vector<8x1xf32>
    %206 = math.rsqrt %205 : vector<8x1xf32>
    %cst_80 = arith.constant 0.000000e+00 : f32
    %207 = vector.broadcast %cst_80 : f32 to vector<8x1xf32>
    %208 = vector.extract_strided_slice %117 {offsets = [0, 0], sizes = [8, 32], strides = [1, 1]} : vector<8x512xf32> to vector<8x32xf32>
    %209 = arith.addf %208, %121 : vector<8x32xf32>
    %210 = vector.broadcast %197 : vector<8x1xf32> to vector<8x32xf32>
    %211 = arith.subf %209, %210 : vector<8x32xf32>
    %212 = vector.broadcast %206 : vector<8x1xf32> to vector<8x32xf32>
    %213 = arith.mulf %211, %212 : vector<8x32xf32>
    %cst_81 = arith.constant 0.000000e+00 : f32
    %214 = vector.broadcast %cst_81 : f32 to vector<8x32xf32>
    %215 = arith.maximumf %213, %214 : vector<8x32xf32>
    %cst_82 = arith.constant dense<0.000000e+00> : vector<8xf32>
    %216 = vector.multi_reduction <add>, %215, %cst_82 [1] : vector<8x32xf32> to vector<8xf32>
    %217 = vector.shape_cast %216 : vector<8xf32> to vector<8x1xf32>
    %218 = arith.addf %207, %217 : vector<8x1xf32>
    %219 = vector.extract_strided_slice %117 {offsets = [0, 32], sizes = [8, 32], strides = [1, 1]} : vector<8x512xf32> to vector<8x32xf32>
    %220 = arith.addf %219, %121 : vector<8x32xf32>
    %221 = vector.broadcast %197 : vector<8x1xf32> to vector<8x32xf32>
    %222 = arith.subf %220, %221 : vector<8x32xf32>
    %223 = vector.broadcast %206 : vector<8x1xf32> to vector<8x32xf32>
    %224 = arith.mulf %222, %223 : vector<8x32xf32>
    %cst_83 = arith.constant 0.000000e+00 : f32
    %225 = vector.broadcast %cst_83 : f32 to vector<8x32xf32>
    %226 = arith.maximumf %224, %225 : vector<8x32xf32>
    %cst_84 = arith.constant dense<0.000000e+00> : vector<8xf32>
    %227 = vector.multi_reduction <add>, %226, %cst_84 [1] : vector<8x32xf32> to vector<8xf32>
    %228 = vector.shape_cast %227 : vector<8xf32> to vector<8x1xf32>
    %229 = arith.addf %218, %228 : vector<8x1xf32>
    %230 = arith.maximumf %215, %226 : vector<8x32xf32>
    %231 = vector.extract_strided_slice %117 {offsets = [0, 64], sizes = [8, 32], strides = [1, 1]} : vector<8x512xf32> to vector<8x32xf32>
    %232 = arith.addf %231, %121 : vector<8x32xf32>
    %233 = vector.broadcast %197 : vector<8x1xf32> to vector<8x32xf32>
    %234 = arith.subf %232, %233 : vector<8x32xf32>
    %235 = vector.broadcast %206 : vector<8x1xf32> to vector<8x32xf32>
    %236 = arith.mulf %234, %235 : vector<8x32xf32>
    %cst_85 = arith.constant 0.000000e+00 : f32
    %237 = vector.broadcast %cst_85 : f32 to vector<8x32xf32>
    %238 = arith.maximumf %236, %237 : vector<8x32xf32>
    %cst_86 = arith.constant dense<0.000000e+00> : vector<8xf32>
    %239 = vector.multi_reduction <add>, %238, %cst_86 [1] : vector<8x32xf32> to vector<8xf32>
    %240 = vector.shape_cast %239 : vector<8xf32> to vector<8x1xf32>
    %241 = arith.addf %229, %240 : vector<8x1xf32>
    %242 = arith.maximumf %230, %238 : vector<8x32xf32>
    %243 = vector.extract_strided_slice %117 {offsets = [0, 96], sizes = [8, 32], strides = [1, 1]} : vector<8x512xf32> to vector<8x32xf32>
    %244 = arith.addf %243, %121 : vector<8x32xf32>
    %245 = vector.broadcast %197 : vector<8x1xf32> to vector<8x32xf32>
    %246 = arith.subf %244, %245 : vector<8x32xf32>
    %247 = vector.broadcast %206 : vector<8x1xf32> to vector<8x32xf32>
    %248 = arith.mulf %246, %247 : vector<8x32xf32>
    %cst_87 = arith.constant 0.000000e+00 : f32
    %249 = vector.broadcast %cst_87 : f32 to vector<8x32xf32>
    %250 = arith.maximumf %248, %249 : vector<8x32xf32>
    %cst_88 = arith.constant dense<0.000000e+00> : vector<8xf32>
    %251 = vector.multi_reduction <add>, %250, %cst_88 [1] : vector<8x32xf32> to vector<8xf32>
    %252 = vector.shape_cast %251 : vector<8xf32> to vector<8x1xf32>
    %253 = arith.addf %241, %252 : vector<8x1xf32>
    %254 = arith.maximumf %242, %250 : vector<8x32xf32>
    %255 = vector.extract_strided_slice %117 {offsets = [0, 128], sizes = [8, 32], strides = [1, 1]} : vector<8x512xf32> to vector<8x32xf32>
    %256 = arith.addf %255, %121 : vector<8x32xf32>
    %257 = vector.broadcast %197 : vector<8x1xf32> to vector<8x32xf32>
    %258 = arith.subf %256, %257 : vector<8x32xf32>
    %259 = vector.broadcast %206 : vector<8x1xf32> to vector<8x32xf32>
    %260 = arith.mulf %258, %259 : vector<8x32xf32>
    %cst_89 = arith.constant 0.000000e+00 : f32
    %261 = vector.broadcast %cst_89 : f32 to vector<8x32xf32>
    %262 = arith.maximumf %260, %261 : vector<8x32xf32>
    %cst_90 = arith.constant dense<0.000000e+00> : vector<8xf32>
    %263 = vector.multi_reduction <add>, %262, %cst_90 [1] : vector<8x32xf32> to vector<8xf32>
    %264 = vector.shape_cast %263 : vector<8xf32> to vector<8x1xf32>
    %265 = arith.addf %253, %264 : vector<8x1xf32>
    %266 = arith.maximumf %254, %262 : vector<8x32xf32>
    %267 = vector.extract_strided_slice %117 {offsets = [0, 160], sizes = [8, 32], strides = [1, 1]} : vector<8x512xf32> to vector<8x32xf32>
    %268 = arith.addf %267, %121 : vector<8x32xf32>
    %269 = vector.broadcast %197 : vector<8x1xf32> to vector<8x32xf32>
    %270 = arith.subf %268, %269 : vector<8x32xf32>
    %271 = vector.broadcast %206 : vector<8x1xf32> to vector<8x32xf32>
    %272 = arith.mulf %270, %271 : vector<8x32xf32>
    %cst_91 = arith.constant 0.000000e+00 : f32
    %273 = vector.broadcast %cst_91 : f32 to vector<8x32xf32>
    %274 = arith.maximumf %272, %273 : vector<8x32xf32>
    %cst_92 = arith.constant dense<0.000000e+00> : vector<8xf32>
    %275 = vector.multi_reduction <add>, %274, %cst_92 [1] : vector<8x32xf32> to vector<8xf32>
    %276 = vector.shape_cast %275 : vector<8xf32> to vector<8x1xf32>
    %277 = arith.addf %265, %276 : vector<8x1xf32>
    %278 = arith.maximumf %266, %274 : vector<8x32xf32>
    %279 = vector.extract_strided_slice %117 {offsets = [0, 192], sizes = [8, 32], strides = [1, 1]} : vector<8x512xf32> to vector<8x32xf32>
    %280 = arith.addf %279, %121 : vector<8x32xf32>
    %281 = vector.broadcast %197 : vector<8x1xf32> to vector<8x32xf32>
    %282 = arith.subf %280, %281 : vector<8x32xf32>
    %283 = vector.broadcast %206 : vector<8x1xf32> to vector<8x32xf32>
    %284 = arith.mulf %282, %283 : vector<8x32xf32>
    %cst_93 = arith.constant 0.000000e+00 : f32
    %285 = vector.broadcast %cst_93 : f32 to vector<8x32xf32>
    %286 = arith.maximumf %284, %285 : vector<8x32xf32>
    %cst_94 = arith.constant dense<0.000000e+00> : vector<8xf32>
    %287 = vector.multi_reduction <add>, %286, %cst_94 [1] : vector<8x32xf32> to vector<8xf32>
    %288 = vector.shape_cast %287 : vector<8xf32> to vector<8x1xf32>
    %289 = arith.addf %277, %288 : vector<8x1xf32>
    %290 = arith.maximumf %278, %286 : vector<8x32xf32>
    %291 = vector.extract_strided_slice %117 {offsets = [0, 224], sizes = [8, 32], strides = [1, 1]} : vector<8x512xf32> to vector<8x32xf32>
    %292 = arith.addf %291, %121 : vector<8x32xf32>
    %293 = vector.broadcast %197 : vector<8x1xf32> to vector<8x32xf32>
    %294 = arith.subf %292, %293 : vector<8x32xf32>
    %295 = vector.broadcast %206 : vector<8x1xf32> to vector<8x32xf32>
    %296 = arith.mulf %294, %295 : vector<8x32xf32>
    %cst_95 = arith.constant 0.000000e+00 : f32
    %297 = vector.broadcast %cst_95 : f32 to vector<8x32xf32>
    %298 = arith.maximumf %296, %297 : vector<8x32xf32>
    %cst_96 = arith.constant dense<0.000000e+00> : vector<8xf32>
    %299 = vector.multi_reduction <add>, %298, %cst_96 [1] : vector<8x32xf32> to vector<8xf32>
    %300 = vector.shape_cast %299 : vector<8xf32> to vector<8x1xf32>
    %301 = arith.addf %289, %300 : vector<8x1xf32>
    %302 = arith.maximumf %290, %298 : vector<8x32xf32>
    %cst_97 = arith.constant 3.906250e-03 : f32
    %303 = vector.broadcast %cst_97 : f32 to vector<8x1xf32>
    %304 = arith.mulf %301, %303 : vector<8x1xf32>
    %c0_98 = arith.constant 0 : index
    %c0_99 = arith.constant 0 : index
    %305 = vector.load %arg12[%c0_98, %c0_99] : memref<8x2xf32, #tpu.memory_space<vmem>>, vector<8x1xf32>
    tpu.vector_store %arg12[%c0_98, %c0_99], %304 {strides = array<i32>} : memref<8x2xf32, #tpu.memory_space<vmem>>, vector<8x1xf32>,
    %306 = vector.extract_strided_slice %120 {offsets = [0, 32], sizes = [8, 32], strides = [1, 1]} : vector<8x64xf32> to vector<8x32xf32>
    %cst_100 = arith.constant 0.000000e+00 : f32
    %307 = vector.broadcast %cst_100 : f32 to vector<8x1xf32>
    %cst_101 = arith.constant 0.000000e+00 : f32
    %308 = vector.broadcast %cst_101 : f32 to vector<8x1xf32>
    %309 = vector.extract_strided_slice %117 {offsets = [0, 256], sizes = [8, 32], strides = [1, 1]} : vector<8x512xf32> to vector<8x32xf32>
    %310 = arith.addf %309, %306 : vector<8x32xf32>
    %cst_102 = arith.constant dense<0.000000e+00> : vector<8xf32>
    %311 = vector.multi_reduction <add>, %310, %cst_102 [1] : vector<8x32xf32> to vector<8xf32>
    %312 = vector.shape_cast %311 : vector<8xf32> to vector<8x1xf32>
    %313 = arith.addf %307, %312 : vector<8x1xf32>
    %314 = arith.mulf %310, %310 : vector<8x32xf32>
    %cst_103 = arith.constant dense<0.000000e+00> : vector<8xf32>
    %315 = vector.multi_reduction <add>, %314, %cst_103 [1] : vector<8x32xf32> to vector<8xf32>
    %316 = vector.shape_cast %315 : vector<8xf32> to vector<8x1xf32>
    %317 = arith.addf %308, %316 : vector<8x1xf32>
    %318 = vector.extract_strided_slice %117 {offsets = [0, 288], sizes = [8, 32], strides = [1, 1]} : vector<8x512xf32> to vector<8x32xf32>
    %319 = arith.addf %318, %306 : vector<8x32xf32>
    %cst_104 = arith.constant dense<0.000000e+00> : vector<8xf32>
    %320 = vector.multi_reduction <add>, %319, %cst_104 [1] : vector<8x32xf32> to vector<8xf32>
    %321 = vector.shape_cast %320 : vector<8xf32> to vector<8x1xf32>
    %322 = arith.addf %313, %321 : vector<8x1xf32>
    %323 = arith.mulf %319, %319 : vector<8x32xf32>
    %cst_105 = arith.constant dense<0.000000e+00> : vector<8xf32>
    %324 = vector.multi_reduction <add>, %323, %cst_105 [1] : vector<8x32xf32> to vector<8xf32>
    %325 = vector.shape_cast %324 : vector<8xf32> to vector<8x1xf32>
    %326 = arith.addf %317, %325 : vector<8x1xf32>
    %327 = vector.extract_strided_slice %117 {offsets = [0, 320], sizes = [8, 32], strides = [1, 1]} : vector<8x512xf32> to vector<8x32xf32>
    %328 = arith.addf %327, %306 : vector<8x32xf32>
    %cst_106 = arith.constant dense<0.000000e+00> : vector<8xf32>
    %329 = vector.multi_reduction <add>, %328, %cst_106 [1] : vector<8x32xf32> to vector<8xf32>
    %330 = vector.shape_cast %329 : vector<8xf32> to vector<8x1xf32>
    %331 = arith.addf %322, %330 : vector<8x1xf32>
    %332 = arith.mulf %328, %328 : vector<8x32xf32>
    %cst_107 = arith.constant dense<0.000000e+00> : vector<8xf32>
    %333 = vector.multi_reduction <add>, %332, %cst_107 [1] : vector<8x32xf32> to vector<8xf32>
    %334 = vector.shape_cast %333 : vector<8xf32> to vector<8x1xf32>
    %335 = arith.addf %326, %334 : vector<8x1xf32>
    %336 = vector.extract_strided_slice %117 {offsets = [0, 352], sizes = [8, 32], strides = [1, 1]} : vector<8x512xf32> to vector<8x32xf32>
    %337 = arith.addf %336, %306 : vector<8x32xf32>
    %cst_108 = arith.constant dense<0.000000e+00> : vector<8xf32>
    %338 = vector.multi_reduction <add>, %337, %cst_108 [1] : vector<8x32xf32> to vector<8xf32>
    %339 = vector.shape_cast %338 : vector<8xf32> to vector<8x1xf32>
    %340 = arith.addf %331, %339 : vector<8x1xf32>
    %341 = arith.mulf %337, %337 : vector<8x32xf32>
    %cst_109 = arith.constant dense<0.000000e+00> : vector<8xf32>
    %342 = vector.multi_reduction <add>, %341, %cst_109 [1] : vector<8x32xf32> to vector<8xf32>
    %343 = vector.shape_cast %342 : vector<8xf32> to vector<8x1xf32>
    %344 = arith.addf %335, %343 : vector<8x1xf32>
    %345 = vector.extract_strided_slice %117 {offsets = [0, 384], sizes = [8, 32], strides = [1, 1]} : vector<8x512xf32> to vector<8x32xf32>
    %346 = arith.addf %345, %306 : vector<8x32xf32>
    %cst_110 = arith.constant dense<0.000000e+00> : vector<8xf32>
    %347 = vector.multi_reduction <add>, %346, %cst_110 [1] : vector<8x32xf32> to vector<8xf32>
    %348 = vector.shape_cast %347 : vector<8xf32> to vector<8x1xf32>
    %349 = arith.addf %340, %348 : vector<8x1xf32>
    %350 = arith.mulf %346, %346 : vector<8x32xf32>
    %cst_111 = arith.constant dense<0.000000e+00> : vector<8xf32>
    %351 = vector.multi_reduction <add>, %350, %cst_111 [1] : vector<8x32xf32> to vector<8xf32>
    %352 = vector.shape_cast %351 : vector<8xf32> to vector<8x1xf32>
    %353 = arith.addf %344, %352 : vector<8x1xf32>
    %354 = vector.extract_strided_slice %117 {offsets = [0, 416], sizes = [8, 32], strides = [1, 1]} : vector<8x512xf32> to vector<8x32xf32>
    %355 = arith.addf %354, %306 : vector<8x32xf32>
    %cst_112 = arith.constant dense<0.000000e+00> : vector<8xf32>
    %356 = vector.multi_reduction <add>, %355, %cst_112 [1] : vector<8x32xf32> to vector<8xf32>
    %357 = vector.shape_cast %356 : vector<8xf32> to vector<8x1xf32>
    %358 = arith.addf %349, %357 : vector<8x1xf32>
    %359 = arith.mulf %355, %355 : vector<8x32xf32>
    %cst_113 = arith.constant dense<0.000000e+00> : vector<8xf32>
    %360 = vector.multi_reduction <add>, %359, %cst_113 [1] : vector<8x32xf32> to vector<8xf32>
    %361 = vector.shape_cast %360 : vector<8xf32> to vector<8x1xf32>
    %362 = arith.addf %353, %361 : vector<8x1xf32>
    %363 = vector.extract_strided_slice %117 {offsets = [0, 448], sizes = [8, 32], strides = [1, 1]} : vector<8x512xf32> to vector<8x32xf32>
    %364 = arith.addf %363, %306 : vector<8x32xf32>
    %cst_114 = arith.constant dense<0.000000e+00> : vector<8xf32>
    %365 = vector.multi_reduction <add>, %364, %cst_114 [1] : vector<8x32xf32> to vector<8xf32>
    %366 = vector.shape_cast %365 : vector<8xf32> to vector<8x1xf32>
    %367 = arith.addf %358, %366 : vector<8x1xf32>
    %368 = arith.mulf %364, %364 : vector<8x32xf32>
    %cst_115 = arith.constant dense<0.000000e+00> : vector<8xf32>
    %369 = vector.multi_reduction <add>, %368, %cst_115 [1] : vector<8x32xf32> to vector<8xf32>
    %370 = vector.shape_cast %369 : vector<8xf32> to vector<8x1xf32>
    %371 = arith.addf %362, %370 : vector<8x1xf32>
    %372 = vector.extract_strided_slice %117 {offsets = [0, 480], sizes = [8, 32], strides = [1, 1]} : vector<8x512xf32> to vector<8x32xf32>
    %373 = arith.addf %372, %306 : vector<8x32xf32>
    %cst_116 = arith.constant dense<0.000000e+00> : vector<8xf32>
    %374 = vector.multi_reduction <add>, %373, %cst_116 [1] : vector<8x32xf32> to vector<8xf32>
    %375 = vector.shape_cast %374 : vector<8xf32> to vector<8x1xf32>
    %376 = arith.addf %367, %375 : vector<8x1xf32>
    %377 = arith.mulf %373, %373 : vector<8x32xf32>
    %cst_117 = arith.constant dense<0.000000e+00> : vector<8xf32>
    %378 = vector.multi_reduction <add>, %377, %cst_117 [1] : vector<8x32xf32> to vector<8xf32>
    %379 = vector.shape_cast %378 : vector<8xf32> to vector<8x1xf32>
    %380 = arith.addf %371, %379 : vector<8x1xf32>
    %cst_118 = arith.constant 3.906250e-03 : f32
    %381 = vector.broadcast %cst_118 : f32 to vector<8x1xf32>
    %382 = arith.mulf %376, %381 : vector<8x1xf32>
    %cst_119 = arith.constant 3.906250e-03 : f32
    %383 = vector.broadcast %cst_119 : f32 to vector<8x1xf32>
    %384 = arith.mulf %380, %383 : vector<8x1xf32>
    %385 = arith.mulf %382, %382 : vector<8x1xf32>
    %386 = arith.subf %384, %385 : vector<8x1xf32>
    %cst_120 = arith.constant 0.000000e+00 : f32
    %387 = vector.broadcast %cst_120 : f32 to vector<8x1xf32>
    %388 = arith.maximumf %386, %387 : vector<8x1xf32>
    %cst_121 = arith.constant 9.99999974E-6 : f32
    %389 = vector.broadcast %cst_121 : f32 to vector<8x1xf32>
    %390 = arith.addf %388, %389 : vector<8x1xf32>
    %391 = math.rsqrt %390 : vector<8x1xf32>
    %cst_122 = arith.constant 0.000000e+00 : f32
    %392 = vector.broadcast %cst_122 : f32 to vector<8x1xf32>
    %393 = vector.extract_strided_slice %117 {offsets = [0, 256], sizes = [8, 32], strides = [1, 1]} : vector<8x512xf32> to vector<8x32xf32>
    %394 = arith.addf %393, %306 : vector<8x32xf32>
    %395 = vector.broadcast %382 : vector<8x1xf32> to vector<8x32xf32>
    %396 = arith.subf %394, %395 : vector<8x32xf32>
    %397 = vector.broadcast %391 : vector<8x1xf32> to vector<8x32xf32>
    %398 = arith.mulf %396, %397 : vector<8x32xf32>
    %cst_123 = arith.constant 0.000000e+00 : f32
    %399 = vector.broadcast %cst_123 : f32 to vector<8x32xf32>
    %400 = arith.maximumf %398, %399 : vector<8x32xf32>
    %cst_124 = arith.constant dense<0.000000e+00> : vector<8xf32>
    %401 = vector.multi_reduction <add>, %400, %cst_124 [1] : vector<8x32xf32> to vector<8xf32>
    %402 = vector.shape_cast %401 : vector<8xf32> to vector<8x1xf32>
    %403 = arith.addf %392, %402 : vector<8x1xf32>
    %404 = vector.extract_strided_slice %117 {offsets = [0, 288], sizes = [8, 32], strides = [1, 1]} : vector<8x512xf32> to vector<8x32xf32>
    %405 = arith.addf %404, %306 : vector<8x32xf32>
    %406 = vector.broadcast %382 : vector<8x1xf32> to vector<8x32xf32>
    %407 = arith.subf %405, %406 : vector<8x32xf32>
    %408 = vector.broadcast %391 : vector<8x1xf32> to vector<8x32xf32>
    %409 = arith.mulf %407, %408 : vector<8x32xf32>
    %cst_125 = arith.constant 0.000000e+00 : f32
    %410 = vector.broadcast %cst_125 : f32 to vector<8x32xf32>
    %411 = arith.maximumf %409, %410 : vector<8x32xf32>
    %cst_126 = arith.constant dense<0.000000e+00> : vector<8xf32>
    %412 = vector.multi_reduction <add>, %411, %cst_126 [1] : vector<8x32xf32> to vector<8xf32>
    %413 = vector.shape_cast %412 : vector<8xf32> to vector<8x1xf32>
    %414 = arith.addf %403, %413 : vector<8x1xf32>
    %415 = arith.maximumf %400, %411 : vector<8x32xf32>
    %416 = vector.extract_strided_slice %117 {offsets = [0, 320], sizes = [8, 32], strides = [1, 1]} : vector<8x512xf32> to vector<8x32xf32>
    %417 = arith.addf %416, %306 : vector<8x32xf32>
    %418 = vector.broadcast %382 : vector<8x1xf32> to vector<8x32xf32>
    %419 = arith.subf %417, %418 : vector<8x32xf32>
    %420 = vector.broadcast %391 : vector<8x1xf32> to vector<8x32xf32>
    %421 = arith.mulf %419, %420 : vector<8x32xf32>
    %cst_127 = arith.constant 0.000000e+00 : f32
    %422 = vector.broadcast %cst_127 : f32 to vector<8x32xf32>
    %423 = arith.maximumf %421, %422 : vector<8x32xf32>
    %cst_128 = arith.constant dense<0.000000e+00> : vector<8xf32>
    %424 = vector.multi_reduction <add>, %423, %cst_128 [1] : vector<8x32xf32> to vector<8xf32>
    %425 = vector.shape_cast %424 : vector<8xf32> to vector<8x1xf32>
    %426 = arith.addf %414, %425 : vector<8x1xf32>
    %427 = arith.maximumf %415, %423 : vector<8x32xf32>
    %428 = vector.extract_strided_slice %117 {offsets = [0, 352], sizes = [8, 32], strides = [1, 1]} : vector<8x512xf32> to vector<8x32xf32>
    %429 = arith.addf %428, %306 : vector<8x32xf32>
    %430 = vector.broadcast %382 : vector<8x1xf32> to vector<8x32xf32>
    %431 = arith.subf %429, %430 : vector<8x32xf32>
    %432 = vector.broadcast %391 : vector<8x1xf32> to vector<8x32xf32>
    %433 = arith.mulf %431, %432 : vector<8x32xf32>
    %cst_129 = arith.constant 0.000000e+00 : f32
    %434 = vector.broadcast %cst_129 : f32 to vector<8x32xf32>
    %435 = arith.maximumf %433, %434 : vector<8x32xf32>
    %cst_130 = arith.constant dense<0.000000e+00> : vector<8xf32>
    %436 = vector.multi_reduction <add>, %435, %cst_130 [1] : vector<8x32xf32> to vector<8xf32>
    %437 = vector.shape_cast %436 : vector<8xf32> to vector<8x1xf32>
    %438 = arith.addf %426, %437 : vector<8x1xf32>
    %439 = arith.maximumf %427, %435 : vector<8x32xf32>
    %440 = vector.extract_strided_slice %117 {offsets = [0, 384], sizes = [8, 32], strides = [1, 1]} : vector<8x512xf32> to vector<8x32xf32>
    %441 = arith.addf %440, %306 : vector<8x32xf32>
    %442 = vector.broadcast %382 : vector<8x1xf32> to vector<8x32xf32>
    %443 = arith.subf %441, %442 : vector<8x32xf32>
    %444 = vector.broadcast %391 : vector<8x1xf32> to vector<8x32xf32>
    %445 = arith.mulf %443, %444 : vector<8x32xf32>
    %cst_131 = arith.constant 0.000000e+00 : f32
    %446 = vector.broadcast %cst_131 : f32 to vector<8x32xf32>
    %447 = arith.maximumf %445, %446 : vector<8x32xf32>
    %cst_132 = arith.constant dense<0.000000e+00> : vector<8xf32>
    %448 = vector.multi_reduction <add>, %447, %cst_132 [1] : vector<8x32xf32> to vector<8xf32>
    %449 = vector.shape_cast %448 : vector<8xf32> to vector<8x1xf32>
    %450 = arith.addf %438, %449 : vector<8x1xf32>
    %451 = arith.maximumf %439, %447 : vector<8x32xf32>
    %452 = vector.extract_strided_slice %117 {offsets = [0, 416], sizes = [8, 32], strides = [1, 1]} : vector<8x512xf32> to vector<8x32xf32>
    %453 = arith.addf %452, %306 : vector<8x32xf32>
    %454 = vector.broadcast %382 : vector<8x1xf32> to vector<8x32xf32>
    %455 = arith.subf %453, %454 : vector<8x32xf32>
    %456 = vector.broadcast %391 : vector<8x1xf32> to vector<8x32xf32>
    %457 = arith.mulf %455, %456 : vector<8x32xf32>
    %cst_133 = arith.constant 0.000000e+00 : f32
    %458 = vector.broadcast %cst_133 : f32 to vector<8x32xf32>
    %459 = arith.maximumf %457, %458 : vector<8x32xf32>
    %cst_134 = arith.constant dense<0.000000e+00> : vector<8xf32>
    %460 = vector.multi_reduction <add>, %459, %cst_134 [1] : vector<8x32xf32> to vector<8xf32>
    %461 = vector.shape_cast %460 : vector<8xf32> to vector<8x1xf32>
    %462 = arith.addf %450, %461 : vector<8x1xf32>
    %463 = arith.maximumf %451, %459 : vector<8x32xf32>
    %464 = vector.extract_strided_slice %117 {offsets = [0, 448], sizes = [8, 32], strides = [1, 1]} : vector<8x512xf32> to vector<8x32xf32>
    %465 = arith.addf %464, %306 : vector<8x32xf32>
    %466 = vector.broadcast %382 : vector<8x1xf32> to vector<8x32xf32>
    %467 = arith.subf %465, %466 : vector<8x32xf32>
    %468 = vector.broadcast %391 : vector<8x1xf32> to vector<8x32xf32>
    %469 = arith.mulf %467, %468 : vector<8x32xf32>
    %cst_135 = arith.constant 0.000000e+00 : f32
    %470 = vector.broadcast %cst_135 : f32 to vector<8x32xf32>
    %471 = arith.maximumf %469, %470 : vector<8x32xf32>
    %cst_136 = arith.constant dense<0.000000e+00> : vector<8xf32>
    %472 = vector.multi_reduction <add>, %471, %cst_136 [1] : vector<8x32xf32> to vector<8xf32>
    %473 = vector.shape_cast %472 : vector<8xf32> to vector<8x1xf32>
    %474 = arith.addf %462, %473 : vector<8x1xf32>
    %475 = arith.maximumf %463, %471 : vector<8x32xf32>
    %476 = vector.extract_strided_slice %117 {offsets = [0, 480], sizes = [8, 32], strides = [1, 1]} : vector<8x512xf32> to vector<8x32xf32>
    %477 = arith.addf %476, %306 : vector<8x32xf32>
    %478 = vector.broadcast %382 : vector<8x1xf32> to vector<8x32xf32>
    %479 = arith.subf %477, %478 : vector<8x32xf32>
    %480 = vector.broadcast %391 : vector<8x1xf32> to vector<8x32xf32>
    %481 = arith.mulf %479, %480 : vector<8x32xf32>
    %cst_137 = arith.constant 0.000000e+00 : f32
    %482 = vector.broadcast %cst_137 : f32 to vector<8x32xf32>
    %483 = arith.maximumf %481, %482 : vector<8x32xf32>
    %cst_138 = arith.constant dense<0.000000e+00> : vector<8xf32>
    %484 = vector.multi_reduction <add>, %483, %cst_138 [1] : vector<8x32xf32> to vector<8xf32>
    %485 = vector.shape_cast %484 : vector<8xf32> to vector<8x1xf32>
    %486 = arith.addf %474, %485 : vector<8x1xf32>
    %487 = arith.maximumf %475, %483 : vector<8x32xf32>
    %cst_139 = arith.constant 3.906250e-03 : f32
    %488 = vector.broadcast %cst_139 : f32 to vector<8x1xf32>
    %489 = arith.mulf %486, %488 : vector<8x1xf32>
    %c0_140 = arith.constant 0 : index
    %c1_141 = arith.constant 1 : index
    %490 = vector.load %arg12[%c0_140, %c1_141] : memref<8x2xf32, #tpu.memory_space<vmem>>, vector<8x1xf32>
    tpu.vector_store %arg12[%c0_140, %c1_141], %489 {strides = array<i32>} : memref<8x2xf32, #tpu.memory_space<vmem>>, vector<8x1xf32>,
    %c0_142 = arith.constant 0 : index
    %c0_143 = arith.constant 0 : index
    %491 = vector.load %arg6[%c0_142, %c0_143] : memref<2x8xf32, #tpu.memory_space<vmem>>, vector<2x8xf32>
    %c0_144 = arith.constant 0 : index
    %c0_145 = arith.constant 0 : index
    %492 = vector.load %arg12[%c0_144, %c0_145] : memref<8x2xf32, #tpu.memory_space<vmem>>, vector<8x2xf32>
    %cst_146 = arith.constant dense<0.000000e+00> : vector<2x2xf32>
    %493 = tpu.matmul %491, %492, %cst_146 {dimension_numbers = #tpu.dot_dimension_numbers<[1], [0], [0], [1], [0, 0, 1, 1], [], []>} : vector<2x8xf32>, vector<8x2xf32>, vector<2x2xf32> -> vector<2x2xf32>
    %cst_147 = arith.constant 0.000000e+00 : f32
    %494 = vector.broadcast %cst_147 : f32 to vector<2x2xf32>
    %495 = arith.maximumf %493, %494 : vector<2x2xf32>
    %c0_148 = arith.constant 0 : index
    %c0_149 = arith.constant 0 : index
    %496 = vector.load %arg7[%c0_148, %c0_149] : memref<8x2xf32, #tpu.memory_space<vmem>>, vector<8x2xf32>
    %cst_150 = arith.constant dense<0.000000e+00> : vector<8x2xf32>
    %497 = tpu.matmul %496, %495, %cst_150 {dimension_numbers = #tpu.dot_dimension_numbers<[1], [0], [0], [1], [0, 0, 1, 1], [], []>} : vector<8x2xf32>, vector<2x2xf32>, vector<8x2xf32> -> vector<8x2xf32>
    %498 = arith.negf %497 : vector<8x2xf32>
    %499 = math.exp %498 : vector<8x2xf32>
    %cst_151 = arith.constant 1.000000e+00 : f32
    %500 = vector.broadcast %cst_151 : f32 to vector<8x2xf32>
    %501 = arith.addf %500, %499 : vector<8x2xf32>
    %502 = arith.divf %500, %501 : vector<8x2xf32>
    %503 = vector.extract_strided_slice %502 {offsets = [0, 0], sizes = [8, 1], strides = [1, 1]} : vector<8x2xf32> to vector<8x1xf32>
    %504 = vector.broadcast %503 : vector<8x1xf32> to vector<8x32xf32>
    %505 = arith.mulf %302, %504 : vector<8x32xf32>
    %c0_152 = arith.constant 0 : index
    %c0_153 = arith.constant 0 : index
    %506 = vector.load %arg8[%c0_152, %c0_153] : memref<8x64xf32, #tpu.memory_space<vmem>>, vector<8x32xf32>
    tpu.vector_store %arg8[%c0_152, %c0_153], %505 {strides = array<i32>} : memref<8x64xf32, #tpu.memory_space<vmem>>, vector<8x32xf32>,
    %507 = vector.extract_strided_slice %502 {offsets = [0, 1], sizes = [8, 1], strides = [1, 1]} : vector<8x2xf32> to vector<8x1xf32>
    %508 = vector.broadcast %507 : vector<8x1xf32> to vector<8x32xf32>
    %509 = arith.mulf %487, %508 : vector<8x32xf32>
    %c0_154 = arith.constant 0 : index
    %c32_155 = arith.constant 32 : index
    %510 = vector.load %arg8[%c0_154, %c32_155] : memref<8x64xf32, #tpu.memory_space<vmem>>, vector<8x32xf32>
    tpu.vector_store %arg8[%c0_154, %c32_155], %509 {strides = array<i32>} : memref<8x64xf32, #tpu.memory_space<vmem>>, vector<8x32xf32>,
    return
  }
}

</mosaic_0001>

<llo_original>
// kernel: tpu_custom_call.1
$region0: #{tpu_custom_call.1}
  #allocation0 [shape = 'u32[]', space=smem, size = 0x4, offset = 0x4, fixed_abs, tag = 'smem constant byte address 0x4 - core index']
  #allocation1 [shape = 'u32[144,128]{1,0:T(1,128)}', space=vmem, size = 0x12000, scoped, tag = 'internal scratch']
  #allocation2 [shape = 'f32[8,512]{1,0:T(8,128)}', space=vmem, size = 0x4000, scoped, tag = 'scratch operand']
  #allocation3 [shape = 'f32[8,64]{1,0:T(8,128)}', space=vmem, size = 0x1000, scoped, tag = 'scratch operand']
  #allocation4 [shape = 'f32[8,2]{1,0:T(8,128)}', space=vmem, size = 0x1000, scoped, tag = 'scratch operand']
  #allocation5 [shape = 'f32[8,2]{1,0:T(8,128)}', space=vmem, size = 0x1000, scoped, tag = 'scratch operand']
  %s0 = inlined_call_operand.hbm [shape: f32[8,512], index: 0, kind: input, shape index: {}]
  %s1 = inlined_call_operand.vmem [shape: f32[8,8], index: 1, kind: input, shape index: {}]
  %s2 = inlined_call_operand.hbm [shape: f32[2,8], index: 2, kind: input, shape index: {}]
  %s3 = inlined_call_operand.vmem [shape: f32[8,2], index: 3, kind: input, shape index: {}]
  %s4 = inlined_call_operand.vmem [shape: f32[8,8], index: 4, kind: input, shape index: {}]
  %s5 = inlined_call_operand.vmem [shape: f32[8,8], index: 5, kind: input, shape index: {}]
  %s6 = inlined_call_operand.vmem [shape: f32[2,8], index: 6, kind: input, shape index: {}]
  %s7 = inlined_call_operand.vmem [shape: f32[8,2], index: 7, kind: input, shape index: {}]
  %s8 = inlined_call_operand.hbm [shape: f32[8,64], index: 8, kind: output, shape index: {}]
  %s9 = sld [smem:[#allocation0]]
  $region50: #{tpu_custom_call.1} parent=0
    _
  %s11 = ssub.s32 1, %s9
  %s12 = scalar_select 0, %s11, %s9
  $region1: #{tpu_custom_call.1} parent=0
    #allocation6 [shape = 'u8[16384]{0}', space=vmem, size = 0x4000, scoped, tag = 'input window, operand 0, single buffered']
    #allocation7 [shape = 's32[1]{0}', space=sflag, size = 0x4, scoped, tag = 'scoped memory for tpu_custom_call.1']
    #allocation8 [shape = 's32[1]{0}', space=sflag, size = 0x4, scoped, tag = 'scoped memory for tpu_custom_call.1']
    #allocation9 [shape = 'u8[1024]{0}', space=vmem, size = 0x400, scoped, tag = 'input window, operand 2, single buffered']
    #allocation10 [shape = 's32[1]{0}', space=sflag, size = 0x4, scoped, tag = 'scoped memory for tpu_custom_call.1']
    #allocation11 [shape = 'u8[4096]{0}', space=vmem, size = 0x1000, scoped, tag = 'output window, operand 0, single buffered']
    %13 = vsyncpa [#allocation7], 0
    %14 = vsyncpa [#allocation10], 0
    %15 = vsyncpa [#allocation8], 0
    // Predicated region
    $region2: #{tpu_custom_call.1} parent=1 // pred_check
      _
    $region3: #{tpu_custom_call.1} parent=1 // pred_check_branch
      %17 = sbr.rel (0) target = $region5
    $region4: #{tpu_custom_call.1} parent=1 // pred_region
      %s19 = ssub.s32 512, 512
      %20 = vsyncadd [#allocation7], %s19
      %s22 = sshll.u32 [#allocation6], 4
      %s23 = int_to_ptr.vmem [resolvable:$true] %s22
      %25 = dma.hbm_to_vmem [thread:$0]  %s0, 512, %s23, [#allocation7]
    $region5: #{tpu_custom_call.1} parent=1 // pred_fallthru
      _
    // Predicated region
    $region6: #{tpu_custom_call.1} parent=1 // pred_check
      _
    $region7: #{tpu_custom_call.1} parent=1 // pred_check_branch
      %27 = sbr.rel (0) target = $region9
    $region8: #{tpu_custom_call.1} parent=1 // pred_region
      _
    $region9: #{tpu_custom_call.1} parent=1 // pred_fallthru
      _
    // Predicated region
    $region10: #{tpu_custom_call.1} parent=1 // pred_check
      _
    $region11: #{tpu_custom_call.1} parent=1 // pred_check_branch
      %29 = sbr.rel (0) target = $region13
    $region12: #{tpu_custom_call.1} parent=1 // pred_region
      %s31 = ssub.s32 32, 32
      %32 = vsyncadd [#allocation10], %s31
      %s34 = sshll.u32 [#allocation9], 4
      %s35 = int_to_ptr.vmem [resolvable:$true] %s34
      %37 = dma.hbm_to_vmem [thread:$0]  %s2, 32, %s35, [#allocation10]
    $region13: #{tpu_custom_call.1} parent=1 // pred_fallthru
      _
    // Predicated region
    $region14: #{tpu_custom_call.1} parent=1 // pred_check
      _
    $region15: #{tpu_custom_call.1} parent=1 // pred_check_branch
      %39 = sbr.rel (0) target = $region17
    $region16: #{tpu_custom_call.1} parent=1 // pred_region
      _
    $region17: #{tpu_custom_call.1} parent=1 // pred_fallthru
      _
    // Predicated region
    $region18: #{tpu_custom_call.1} parent=1 // pred_check
      _
    $region19: #{tpu_custom_call.1} parent=1 // pred_check_branch
      %41 = sbr.rel (0) target = $region21
    $region20: #{tpu_custom_call.1} parent=1 // pred_region
      _
    $region21: #{tpu_custom_call.1} parent=1 // pred_fallthru
      _
    // Predicated region
    $region22: #{tpu_custom_call.1} parent=1 // pred_check
      _
    $region23: #{tpu_custom_call.1} parent=1 // pred_check_branch
      %43 = sbr.rel (0) target = $region25
    $region24: #{tpu_custom_call.1} parent=1 // pred_region
      _
    $region25: #{tpu_custom_call.1} parent=1 // pred_fallthru
      _
    // Predicated region
    $region26: #{tpu_custom_call.1} parent=1 // pred_check
      _
    $region27: #{tpu_custom_call.1} parent=1 // pred_check_branch
      %45 = sbr.rel (0) target = $region29
    $region28: #{tpu_custom_call.1} parent=1 // pred_region
      _
    $region29: #{tpu_custom_call.1} parent=1 // pred_fallthru
      _
    // Predicated region
    $region30: #{tpu_custom_call.1} parent=1 // pred_check
      _
    $region31: #{tpu_custom_call.1} parent=1 // pred_check_branch
      %47 = sbr.rel (0) target = $region33
    $region32: #{tpu_custom_call.1} parent=1 // pred_region
      _
    $region33: #{tpu_custom_call.1} parent=1 // pred_fallthru
      _
    // Predicated region
    $region34: #{tpu_custom_call.1} parent=1 // pred_check
      _
    $region35: #{tpu_custom_call.1} parent=1 // pred_check_branch
      %49 = sbr.rel (0) target = $region37
    $region36: #{tpu_custom_call.1} parent=1 // pred_region
      %50 = dma.done [#allocation7], 512
    $region37: #{tpu_custom_call.1} parent=1 // pred_fallthru
      _
    // Predicated region
    $region38: #{tpu_custom_call.1} parent=1 // pred_check
      _
    $region39: #{tpu_custom_call.1} parent=1 // pred_check_branch
      %52 = sbr.rel (0) target = $region41
    $region40: #{tpu_custom_call.1} parent=1 // pred_region
      %53 = dma.done [#allocation10], 32
    $region41: #{tpu_custom_call.1} parent=1 // pred_fallthru
      _
    %v54 = vld [vmem:[#allocation6] sm:$0xff]
    %v55 = vld [vmem:[#allocation6 + $0x8] sm:$0xff]
    %v56 = vld [vmem:[#allocation6 + $0x10] sm:$0xff]
    %v57 = vld [vmem:[#allocation6 + $0x18] sm:$0xff]
    %v58 = vld [vmem:[%s1] sm:$0xff]
    %vm59 = vcmask 64512
    %v61 = vsel %vm59, %v58, 0
    %63 = vmatprep.subr.mxu0 %v55
    %64 = vmatpush1.msra.mxu0 %v54
    %65 = vmatprep.subr.mxu0 0.0
    %66 = vmatpush1.msra.mxu0 0.0
    %67 = vmatprep.subr.mxu0 0.0
    %68 = vmatpush1.msra.mxu0 0.0
    %69 = vmatprep.subr.mxu0 0.0
    %70 = vmatpush1.msra.mxu0 0.0
    %71 = vmatprep.subr.mxu0 0.0
    %72 = vmatpush1.msra.mxu0 0.0
    %73 = vmatprep.subr.mxu0 0.0
    %74 = vmatpush1.msra.mxu0 0.0
    %75 = vmatprep.subr.mxu0 0.0
    %76 = vmatpush1.msra.mxu0 0.0
    %77 = vmatprep.subr.mxu0 0.0
    %78 = vmatpush1.msra.mxu0 0.0
    %79 = vmatprep.subr.mxu0 0.0
    %80 = vmatpush1.msra.mxu0 0.0
    %81 = vmatprep.subr.mxu0 0.0
    %82 = vmatpush1.msra.mxu0 0.0
    %83 = vmatprep.subr.mxu0 0.0
    %84 = vmatpush1.msra.mxu0 0.0
    %85 = vmatprep.subr.mxu0 0.0
    %86 = vmatpush1.msra.mxu0 0.0
    %87 = vmatprep.subr.mxu0 0.0
    %88 = vmatpush1.msra.mxu0 0.0
    %89 = vmatprep.subr.mxu0 0.0
    %90 = vmatpush1.msra.mxu0 0.0
    %91 = vmatprep.subr.mxu0 0.0
    %92 = vmatpush1.msra.mxu0 0.0
    %93 = vmatprep.subr.mxu0 0.0
    %94 = vmatpush1.msra.mxu0 0.0
    %95 = vmatprep.subr.mxu0 0.0
    %96 = vmatpush1.msra.mxu0 0.0
    %97 = vmatprep.subr.mxu0 0.0
    %98 = vmatpush1.msra.mxu0 0.0
    %99 = vmatprep.subr.mxu0 0.0
    %100 = vmatpush1.msra.mxu0 0.0
    %101 = vmatprep.subr.mxu0 0.0
    %102 = vmatpush1.msra.mxu0 0.0
    %103 = vmatprep.subr.mxu0 0.0
    %104 = vmatpush1.msra.mxu0 0.0
    %105 = vmatprep.subr.mxu0 0.0
    %106 = vmatpush1.msra.mxu0 0.0
    %107 = vmatprep.subr.mxu0 0.0
    %108 = vmatpush1.msra.mxu0 0.0
    %109 = vmatprep.subr.mxu0 0.0
    %110 = vmatpush1.msra.mxu0 0.0
    %111 = vmatprep.subr.mxu0 0.0
    %112 = vmatpush1.msra.mxu0 0.0
    %113 = vmatprep.subr.mxu0 0.0
    %114 = vmatpush1.msra.mxu0 0.0
    %115 = vmatprep.subr.mxu0 0.0
    %116 = vmatpush1.msra.mxu0 0.0
    %117 = vmatprep.subr.mxu0 0.0
    %118 = vmatpush1.msra.mxu0 0.0
    %119 = vmatprep.subr.mxu0 0.0
    %120 = vmatpush1.msra.mxu0 0.0
    %121 = vmatprep.subr.mxu0 0.0
    %122 = vmatpush1.msra.mxu0 0.0
    %123 = vmatprep.subr.mxu0 0.0
    %124 = vmatpush1.msra.mxu0 0.0
    %125 = vmatprep.subr.mxu0 0.0
    %126 = vmatpush1.msra.mxu0 0.0
    %127 = vmatprep.mubr.f32.mxu0 0.0
    %128 = vmatmul.mubr.f32.gmra.mrb[0].mxu0 %v61
    %v129 = vpop.f32.mrb[0].mxu0
    %v130 = vadd.f32 0.0, %v129
    %v131 = vpop.f32.mrb[0].mxu0
    %v132 = vadd.f32 0.0, %v131
    %133 = vdwg.mxu0
    %134 = vmatprep.subr.mxu0 %v57
    %135 = vmatpush1.msra.mxu0 %v56
    %136 = vmatprep.subr.mxu0 0.0
    %137 = vmatpush1.msra.mxu0 0.0
    %138 = vmatprep.subr.mxu0 0.0
    %139 = vmatpush1.msra.mxu0 0.0
    %140 = vmatprep.subr.mxu0 0.0
    %141 = vmatpush1.msra.mxu0 0.0
    %142 = vmatprep.subr.mxu0 0.0
    %143 = vmatpush1.msra.mxu0 0.0
    %144 = vmatprep.subr.mxu0 0.0
    %145 = vmatpush1.msra.mxu0 0.0
    %146 = vmatprep.subr.mxu0 0.0
    %147 = vmatpush1.msra.mxu0 0.0
    %148 = vmatprep.subr.mxu0 0.0
    %149 = vmatpush1.msra.mxu0 0.0
    %150 = vmatprep.subr.mxu0 0.0
    %151 = vmatpush1.msra.mxu0 0.0
    %152 = vmatprep.subr.mxu0 0.0
    %153 = vmatpush1.msra.mxu0 0.0
    %154 = vmatprep.subr.mxu0 0.0
    %155 = vmatpush1.msra.mxu0 0.0
    %156 = vmatprep.subr.mxu0 0.0
    %157 = vmatpush1.msra.mxu0 0.0
    %158 = vmatprep.subr.mxu0 0.0
    %159 = vmatpush1.msra.mxu0 0.0
    %160 = vmatprep.subr.mxu0 0.0
    %161 = vmatpush1.msra.mxu0 0.0
    %162 = vmatprep.subr.mxu0 0.0
    %163 = vmatpush1.msra.mxu0 0.0
    %164 = vmatprep.subr.mxu0 0.0
    %165 = vmatpush1.msra.mxu0 0.0
    %166 = vmatprep.subr.mxu0 0.0
    %167 = vmatpush1.msra.mxu0 0.0
    %168 = vmatprep.subr.mxu0 0.0
    %169 = vmatpush1.msra.mxu0 0.0
    %170 = vmatprep.subr.mxu0 0.0
    %171 = vmatpush1.msra.mxu0 0.0
    %172 = vmatprep.subr.mxu0 0.0
    %173 = vmatpush1.msra.mxu0 0.0
    %174 = vmatprep.subr.mxu0 0.0
    %175 = vmatpush1.msra.mxu0 0.0
    %176 = vmatprep.subr.mxu0 0.0
    %177 = vmatpush1.msra.mxu0 0.0
    %178 = vmatprep.subr.mxu0 0.0
    %179 = vmatpush1.msra.mxu0 0.0
    %180 = vmatprep.subr.mxu0 0.0
    %181 = vmatpush1.msra.mxu0 0.0
    %182 = vmatprep.subr.mxu0 0.0
    %183 = vmatpush1.msra.mxu0 0.0
    %184 = vmatprep.subr.mxu0 0.0
    %185 = vmatpush1.msra.mxu0 0.0
    %186 = vmatprep.subr.mxu0 0.0
    %187 = vmatpush1.msra.mxu0 0.0
    %188 = vmatprep.subr.mxu0 0.0
    %189 = vmatpush1.msra.mxu0 0.0
    %190 = vmatprep.subr.mxu0 0.0
    %191 = vmatpush1.msra.mxu0 0.0
    %192 = vmatprep.subr.mxu0 0.0
    %193 = vmatpush1.msra.mxu0 0.0
    %194 = vmatprep.subr.mxu0 0.0
    %195 = vmatpush1.msra.mxu0 0.0
    %196 = vmatprep.subr.mxu0 0.0
    %197 = vmatpush1.msra.mxu0 0.0
    %198 = vmatprep.mubr.f32.mxu0 0.0
    %199 = vmatmul.mubr.f32.gmra.mrb[0].mxu0 %v61
    %v200 = vpop.f32.mrb[0].mxu0
    %v201 = vadd.f32 0.0, %v200
    %v202 = vpop.f32.mrb[0].mxu0
    %v203 = vadd.f32 0.0, %v202
    %204 = vdwg.mxu0
    %v205 = vadd.f32 %v130, %v132
    %206 = vadd.xlane.f32.xlu0 %v205
    %v207 = vpop.xlane.xlu0 %206
    %v208 = vmul.f32 %v207, 0.00390625
    %v209 = vmul.f32 %v130, %v130
    %v210 = vmul.f32 %v132, %v132
    %v211 = vadd.f32 %v209, %v210
    %212 = vadd.xlane.f32.xlu0 %v211
    %v213 = vpop.xlane.xlu0 %212
    %v214 = vmul.f32 %v213, 0.00390625
    %v215 = vmul.f32 %v208, %v208
    %v216 = vsub.f32 %v214, %v215
    %v217 = vmax.f32 %v216, 0.0
    %v218 = vsub.f32 %v130, %v208
    %v219 = vsub.f32 %v132, %v208
    %v220 = vadd.f32 %v217, 1e-05
    %v221 = vrsqrt.pop %v220
    %v222 = vmul.f32 %v218, %v221
    %v223 = vmul.f32 %v219, %v221
    %v224 = vmax.f32 %v222, 0.0
    %v225 = vmax.f32 %v223, 0.0
    %226 = vst [vmem:[#allocation2] sm:$0xff] %v224
    %227 = vst [vmem:[#allocation2 + $0x8] sm:$0xff] %v225
    %v228 = vadd.f32 %v224, %v225
    %229 = vadd.xlane.f32.xlu0 %v228
    %v230 = vpop.xlane.xlu0 %229
    %v231 = vmul.f32 %v230, 0.00390625
    %vm232 = vcmask 7168
    %233 = vst.msk [vmem:[#allocation4] sm:$0xff] %vm232, %v231
    %v234 = vadd.f32 %v201, %v203
    %235 = vadd.xlane.f32.xlu0 %v234
    %v236 = vpop.xlane.xlu0 %235
    %v237 = vmul.f32 %v236, 0.00390625
    %v238 = vmul.f32 %v201, %v201
    %v239 = vmul.f32 %v203, %v203
    %v240 = vadd.f32 %v238, %v239
    %241 = vadd.xlane.f32.xlu0 %v240
    %v242 = vpop.xlane.xlu0 %241
    %v243 = vmul.f32 %v242, 0.00390625
    %v244 = vmul.f32 %v237, %v237
    %v245 = vsub.f32 %v243, %v244
    %v246 = vmax.f32 %v245, 0.0
    %v247 = vsub.f32 %v201, %v237
    %v248 = vsub.f32 %v203, %v237
    %v249 = vadd.f32 %v246, 1e-05
    %v250 = vrsqrt.pop %v249
    %v251 = vmul.f32 %v247, %v250
    %v252 = vmul.f32 %v248, %v250
    %v253 = vmax.f32 %v251, 0.0
    %v254 = vmax.f32 %v252, 0.0
    %255 = vst [vmem:[#allocation2 + $0x10] sm:$0xff] %v253
    %256 = vst [vmem:[#allocation2 + $0x18] sm:$0xff] %v254
    %v257 = vadd.f32 %v253, %v254
    %258 = vadd.xlane.f32.xlu0 %v257
    %v259 = vpop.xlane.xlu0 %258
    %v260 = vmul.f32 %v259, 0.00390625
    %vm261 = vcmask 15368
    %262 = vst.msk [vmem:[#allocation4] sm:$0xff] %vm261, %v260
    %v263 = vld [vmem:[#allocation9] sm:$0x3]
    %v264 = vld [vmem:[#allocation4] sm:$0xff]
    %v266 = vsel %vm59, %v263, 0
    %268 = vmatprep.subr.mxu0 0.0
    %269 = vmatpush1.msra.mxu0 %v264
    %270 = vmatprep.subr.mxu0 0.0
    %271 = vmatpush1.msra.mxu0 0.0
    %272 = vmatprep.subr.mxu0 0.0
    %273 = vmatpush1.msra.mxu0 0.0
    %274 = vmatprep.subr.mxu0 0.0
    %275 = vmatpush1.msra.mxu0 0.0
    %276 = vmatprep.subr.mxu0 0.0
    %277 = vmatpush1.msra.mxu0 0.0
    %278 = vmatprep.subr.mxu0 0.0
    %279 = vmatpush1.msra.mxu0 0.0
    %280 = vmatprep.subr.mxu0 0.0
    %281 = vmatpush1.msra.mxu0 0.0
    %282 = vmatprep.subr.mxu0 0.0
    %283 = vmatpush1.msra.mxu0 0.0
    %284 = vmatprep.subr.mxu0 0.0
    %285 = vmatpush1.msra.mxu0 0.0
    %286 = vmatprep.subr.mxu0 0.0
    %287 = vmatpush1.msra.mxu0 0.0
    %288 = vmatprep.subr.mxu0 0.0
    %289 = vmatpush1.msra.mxu0 0.0
    %290 = vmatprep.subr.mxu0 0.0
    %291 = vmatpush1.msra.mxu0 0.0
    %292 = vmatprep.subr.mxu0 0.0
    %293 = vmatpush1.msra.mxu0 0.0
    %294 = vmatprep.subr.mxu0 0.0
    %295 = vmatpush1.msra.mxu0 0.0
    %296 = vmatprep.subr.mxu0 0.0
    %297 = vmatpush1.msra.mxu0 0.0
    %298 = vmatprep.subr.mxu0 0.0
    %299 = vmatpush1.msra.mxu0 0.0
    %300 = vmatprep.subr.mxu0 0.0
    %301 = vmatpush1.msra.mxu0 0.0
    %302 = vmatprep.subr.mxu0 0.0
    %303 = vmatpush1.msra.mxu0 0.0
    %304 = vmatprep.subr.mxu0 0.0
    %305 = vmatpush1.msra.mxu0 0.0
    %306 = vmatprep.subr.mxu0 0.0
    %307 = vmatpush1.msra.mxu0 0.0
    %308 = vmatprep.subr.mxu0 0.0
    %309 = vmatpush1.msra.mxu0 0.0
    %310 = vmatprep.subr.mxu0 0.0
    %311 = vmatpush1.msra.mxu0 0.0
    %312 = vmatprep.subr.mxu0 0.0
    %313 = vmatpush1.msra.mxu0 0.0
    %314 = vmatprep.subr.mxu0 0.0
    %315 = vmatpush1.msra.mxu0 0.0
    %316 = vmatprep.subr.mxu0 0.0
    %317 = vmatpush1.msra.mxu0 0.0
    %318 = vmatprep.subr.mxu0 0.0
    %319 = vmatpush1.msra.mxu0 0.0
    %320 = vmatprep.subr.mxu0 0.0
    %321 = vmatpush1.msra.mxu0 0.0
    %322 = vmatprep.subr.mxu0 0.0
    %323 = vmatpush1.msra.mxu0 0.0
    %324 = vmatprep.subr.mxu0 0.0
    %325 = vmatpush1.msra.mxu0 0.0
    %326 = vmatprep.subr.mxu0 0.0
    %327 = vmatpush1.msra.mxu0 0.0
    %328 = vmatprep.subr.mxu0 0.0
    %329 = vmatpush1.msra.mxu0 0.0
    %330 = vmatprep.subr.mxu0 0.0
    %331 = vmatpush1.msra.mxu0 0.0
    %332 = vmatprep.mubr.f32.mxu0 0.0
    %333 = vmatmul.mubr.f32.gmra.mrb[0].mxu0 %v266
    %v334 = vpop.f32.mrb[0].mxu0
    %v335 = vadd.f32 0.0, %v334
    %v336 = vpop.f32.mrb[0].mxu0
    %337 = vdwg.mxu0
    %v338 = vmax.f32 %v335, 0.0
    %v339 = vld [vmem:[%s3] sm:$0xff]
    %vm340 = vcmask 15360
    %v342 = vsel %vm340, %v339, 0
    %vm344 = vcmask 1041408
    %v346 = vsel %vm344, %v338, 0
    %348 = vmatprep.subr.mxu0 0.0
    %349 = vmatpush1.msra.mxu0 %v346
    %350 = vmatprep.subr.mxu0 0.0
    %351 = vmatpush1.msra.mxu0 0.0
    %352 = vmatprep.subr.mxu0 0.0
    %353 = vmatpush1.msra.mxu0 0.0
    %354 = vmatprep.subr.mxu0 0.0
    %355 = vmatpush1.msra.mxu0 0.0
    %356 = vmatprep.subr.mxu0 0.0
    %357 = vmatpush1.msra.mxu0 0.0
    %358 = vmatprep.subr.mxu0 0.0
    %359 = vmatpush1.msra.mxu0 0.0
    %360 = vmatprep.subr.mxu0 0.0
    %361 = vmatpush1.msra.mxu0 0.0
    %362 = vmatprep.subr.mxu0 0.0
    %363 = vmatpush1.msra.mxu0 0.0
    %364 = vmatprep.subr.mxu0 0.0
    %365 = vmatpush1.msra.mxu0 0.0
    %366 = vmatprep.subr.mxu0 0.0
    %367 = vmatpush1.msra.mxu0 0.0
    %368 = vmatprep.subr.mxu0 0.0
    %369 = vmatpush1.msra.mxu0 0.0
    %370 = vmatprep.subr.mxu0 0.0
    %371 = vmatpush1.msra.mxu0 0.0
    %372 = vmatprep.subr.mxu0 0.0
    %373 = vmatpush1.msra.mxu0 0.0
    %374 = vmatprep.subr.mxu0 0.0
    %375 = vmatpush1.msra.mxu0 0.0
    %376 = vmatprep.subr.mxu0 0.0
    %377 = vmatpush1.msra.mxu0 0.0
    %378 = vmatprep.subr.mxu0 0.0
    %379 = vmatpush1.msra.mxu0 0.0
    %380 = vmatprep.subr.mxu0 0.0
    %381 = vmatpush1.msra.mxu0 0.0
    %382 = vmatprep.subr.mxu0 0.0
    %383 = vmatpush1.msra.mxu0 0.0
    %384 = vmatprep.subr.mxu0 0.0
    %385 = vmatpush1.msra.mxu0 0.0
    %386 = vmatprep.subr.mxu0 0.0
    %387 = vmatpush1.msra.mxu0 0.0
    %388 = vmatprep.subr.mxu0 0.0
    %389 = vmatpush1.msra.mxu0 0.0
    %390 = vmatprep.subr.mxu0 0.0
    %391 = vmatpush1.msra.mxu0 0.0
    %392 = vmatprep.subr.mxu0 0.0
    %393 = vmatpush1.msra.mxu0 0.0
    %394 = vmatprep.subr.mxu0 0.0
    %395 = vmatpush1.msra.mxu0 0.0
    %396 = vmatprep.subr.mxu0 0.0
    %397 = vmatpush1.msra.mxu0 0.0
    %398 = vmatprep.subr.mxu0 0.0
    %399 = vmatpush1.msra.mxu0 0.0
    %400 = vmatprep.subr.mxu0 0.0
    %401 = vmatpush1.msra.mxu0 0.0
    %402 = vmatprep.subr.mxu0 0.0
    %403 = vmatpush1.msra.mxu0 0.0
    %404 = vmatprep.subr.mxu0 0.0
    %405 = vmatpush1.msra.mxu0 0.0
    %406 = vmatprep.subr.mxu0 0.0
    %407 = vmatpush1.msra.mxu0 0.0
    %408 = vmatprep.subr.mxu0 0.0
    %409 = vmatpush1.msra.mxu0 0.0
    %410 = vmatprep.subr.mxu0 0.0
    %411 = vmatpush1.msra.mxu0 0.0
    %412 = vmatprep.mubr.f32.mxu0 0.0
    %413 = vmatmul.mubr.f32.gmra.mrb[0].mxu0 %v342
    %v414 = vpop.f32.mrb[0].mxu0
    %v415 = vadd.f32 0.0, %v414
    %v416 = vpop.f32.mrb[0].mxu0
    %417 = vdwg.mxu0
    %v418 = vxor.u32 %v415, 2147483648
    %v419 = vmul.f32 %v418, 1.442695
    %v420 = vpow.pop %v419
    %v421 = vadd.f32 %v420, 1.0
    %v422 = vrcp.pop %v421
    %v423 = vmul.f32 1.0, %v422
    %v424 = vld [vmem:[#allocation2] sm:$0xff]
    %v425 = vld [vmem:[#allocation2 + $0x8] sm:$0xff]
    %427 = vset.pattern.permute.xlu0 0
    %428 = vperm.xlu0 %427, %v423
    %v429 = vpop.permute.xlu0 %428
    %v431 = vmul.f32 %v424, %v429
    %v432 = vmul.f32 %v425, %v429
    %433 = vst [vmem:[#allocation2] sm:$0xff] %v431
    %434 = vst [vmem:[#allocation2 + $0x8] sm:$0xff] %v432
    %436 = vrot.lane.b32.xlu0 %v431, 96
    %v437 = vpop.permute.xlu0 %436
    %v439 = vmax.f32 %v431, %v437
    %440 = vrot.lane.b32.xlu0 %v431, 64
    %v441 = vpop.permute.xlu0 %440
    %v443 = vmax.f32 %v439, %v441
    %444 = vrot.lane.b32.xlu0 %v431, 32
    %v445 = vpop.permute.xlu0 %444
    %v447 = vmax.f32 %v443, %v445
    %v448 = vmax.f32 %v447, %v432
    %450 = vrot.lane.b32.xlu0 %v432, 96
    %v451 = vpop.permute.xlu0 %450
    %v453 = vmax.f32 %v448, %v451
    %454 = vrot.lane.b32.xlu0 %v432, 64
    %v455 = vpop.permute.xlu0 %454
    %v457 = vmax.f32 %v453, %v455
    %458 = vrot.lane.b32.xlu0 %v432, 32
    %v459 = vpop.permute.xlu0 %458
    %v461 = vmax.f32 %v457, %v459
    %vm462 = vcmask 261120
    %463 = vst.msk [vmem:[#allocation3] sm:$0xff] %vm462, %v461
    %v464 = vld [vmem:[#allocation2 + $0x10] sm:$0xff]
    %v465 = vld [vmem:[#allocation2 + $0x18] sm:$0xff]
    %466 = vset.pattern.permute.xlu0 1
    %467 = vperm.xlu0 %466, %v423
    %v468 = vpop.permute.xlu0 %467
    %v470 = vmul.f32 %v464, %v468
    %v471 = vmul.f32 %v465, %v468
    %472 = vst [vmem:[#allocation2 + $0x10] sm:$0xff] %v470
    %473 = vst [vmem:[#allocation2 + $0x18] sm:$0xff] %v471
    %475 = vrot.lane.b32.xlu0 %v470, 96
    %v476 = vpop.permute.xlu0 %475
    %v478 = vmax.f32 %v470, %v476
    %479 = vrot.lane.b32.xlu0 %v470, 64
    %v480 = vpop.permute.xlu0 %479
    %v482 = vmax.f32 %v478, %v480
    %483 = vrot.lane.b32.xlu0 %v470, 32
    %v484 = vpop.permute.xlu0 %483
    %v486 = vmax.f32 %v482, %v484
    %v487 = vmax.f32 %v486, %v471
    %489 = vrot.lane.b32.xlu0 %v471, 96
    %v490 = vpop.permute.xlu0 %489
    %v492 = vmax.f32 %v487, %v490
    %493 = vrot.lane.b32.xlu0 %v471, 64
    %v494 = vpop.permute.xlu0 %493
    %v496 = vmax.f32 %v492, %v494
    %497 = vrot.lane.b32.xlu0 %v471, 32
    %v498 = vpop.permute.xlu0 %497
    %v500 = vmax.f32 %v496, %v498
    %502 = vrot.lane.b32.xlu0 %v500, 32
    %v503 = vpop.permute.xlu0 %502
    %vm505 = vcmask 523520
    %506 = vst.msk [vmem:[#allocation3] sm:$0xff] %vm505, %v503
    %v507 = vld [vmem:[%s4] sm:$0xff]
    %v508 = vld [vmem:[#allocation2] sm:$0xff]
    %v509 = vld [vmem:[#allocation2 + $0x8] sm:$0xff]
    %v510 = vld [vmem:[#allocation2 + $0x10] sm:$0xff]
    %v511 = vld [vmem:[#allocation2 + $0x18] sm:$0xff]
    %v513 = vsel %vm59, %v507, 0
    %515 = vmatprep.subr.mxu0 %v509
    %516 = vmatpush1.msra.mxu0 %v508
    %517 = vmatprep.subr.mxu0 0.0
    %518 = vmatpush1.msra.mxu0 0.0
    %519 = vmatprep.subr.mxu0 0.0
    %520 = vmatpush1.msra.mxu0 0.0
    %521 = vmatprep.subr.mxu0 0.0
    %522 = vmatpush1.msra.mxu0 0.0
    %523 = vmatprep.subr.mxu0 0.0
    %524 = vmatpush1.msra.mxu0 0.0
    %525 = vmatprep.subr.mxu0 0.0
    %526 = vmatpush1.msra.mxu0 0.0
    %527 = vmatprep.subr.mxu0 0.0
    %528 = vmatpush1.msra.mxu0 0.0
    %529 = vmatprep.subr.mxu0 0.0
    %530 = vmatpush1.msra.mxu0 0.0
    %531 = vmatprep.subr.mxu0 0.0
    %532 = vmatpush1.msra.mxu0 0.0
    %533 = vmatprep.subr.mxu0 0.0
    %534 = vmatpush1.msra.mxu0 0.0
    %535 = vmatprep.subr.mxu0 0.0
    %536 = vmatpush1.msra.mxu0 0.0
    %537 = vmatprep.subr.mxu0 0.0
    %538 = vmatpush1.msra.mxu0 0.0
    %539 = vmatprep.subr.mxu0 0.0
    %540 = vmatpush1.msra.mxu0 0.0
    %541 = vmatprep.subr.mxu0 0.0
    %542 = vmatpush1.msra.mxu0 0.0
    %543 = vmatprep.subr.mxu0 0.0
    %544 = vmatpush1.msra.mxu0 0.0
    %545 = vmatprep.subr.mxu0 0.0
    %546 = vmatpush1.msra.mxu0 0.0
    %547 = vmatprep.subr.mxu0 0.0
    %548 = vmatpush1.msra.mxu0 0.0
    %549 = vmatprep.subr.mxu0 0.0
    %550 = vmatpush1.msra.mxu0 0.0
    %551 = vmatprep.subr.mxu0 0.0
    %552 = vmatpush1.msra.mxu0 0.0
    %553 = vmatprep.subr.mxu0 0.0
    %554 = vmatpush1.msra.mxu0 0.0
    %555 = vmatprep.subr.mxu0 0.0
    %556 = vmatpush1.msra.mxu0 0.0
    %557 = vmatprep.subr.mxu0 0.0
    %558 = vmatpush1.msra.mxu0 0.0
    %559 = vmatprep.subr.mxu0 0.0
    %560 = vmatpush1.msra.mxu0 0.0
    %561 = vmatprep.subr.mxu0 0.0
    %562 = vmatpush1.msra.mxu0 0.0
    %563 = vmatprep.subr.mxu0 0.0
    %564 = vmatpush1.msra.mxu0 0.0
    %565 = vmatprep.subr.mxu0 0.0
    %566 = vmatpush1.msra.mxu0 0.0
    %567 = vmatprep.subr.mxu0 0.0
    %568 = vmatpush1.msra.mxu0 0.0
    %569 = vmatprep.subr.mxu0 0.0
    %570 = vmatpush1.msra.mxu0 0.0
    %571 = vmatprep.subr.mxu0 0.0
    %572 = vmatpush1.msra.mxu0 0.0
    %573 = vmatprep.subr.mxu0 0.0
    %574 = vmatpush1.msra.mxu0 0.0
    %575 = vmatprep.subr.mxu0 0.0
    %576 = vmatpush1.msra.mxu0 0.0
    %577 = vmatprep.subr.mxu0 0.0
    %578 = vmatpush1.msra.mxu0 0.0
    %579 = vmatprep.mubr.f32.mxu0 0.0
    %580 = vmatmul.mubr.f32.gmra.mrb[0].mxu0 %v513
    %v581 = vpop.f32.mrb[0].mxu0
    %v582 = vadd.f32 0.0, %v581
    %v583 = vpop.f32.mrb[0].mxu0
    %v584 = vadd.f32 0.0, %v583
    %585 = vdwg.mxu0
    %586 = vmatprep.subr.mxu0 %v511
    %587 = vmatpush1.msra.mxu0 %v510
    %588 = vmatprep.subr.mxu0 0.0
    %589 = vmatpush1.msra.mxu0 0.0
    %590 = vmatprep.subr.mxu0 0.0
    %591 = vmatpush1.msra.mxu0 0.0
    %592 = vmatprep.subr.mxu0 0.0
    %593 = vmatpush1.msra.mxu0 0.0
    %594 = vmatprep.subr.mxu0 0.0
    %595 = vmatpush1.msra.mxu0 0.0
    %596 = vmatprep.subr.mxu0 0.0
    %597 = vmatpush1.msra.mxu0 0.0
    %598 = vmatprep.subr.mxu0 0.0
    %599 = vmatpush1.msra.mxu0 0.0
    %600 = vmatprep.subr.mxu0 0.0
    %601 = vmatpush1.msra.mxu0 0.0
    %602 = vmatprep.subr.mxu0 0.0
    %603 = vmatpush1.msra.mxu0 0.0
    %604 = vmatprep.subr.mxu0 0.0
    %605 = vmatpush1.msra.mxu0 0.0
    %606 = vmatprep.subr.mxu0 0.0
    %607 = vmatpush1.msra.mxu0 0.0
    %608 = vmatprep.subr.mxu0 0.0
    %609 = vmatpush1.msra.mxu0 0.0
    %610 = vmatprep.subr.mxu0 0.0
    %611 = vmatpush1.msra.mxu0 0.0
    %612 = vmatprep.subr.mxu0 0.0
    %613 = vmatpush1.msra.mxu0 0.0
    %614 = vmatprep.subr.mxu0 0.0
    %615 = vmatpush1.msra.mxu0 0.0
    %616 = vmatprep.subr.mxu0 0.0
    %617 = vmatpush1.msra.mxu0 0.0
    %618 = vmatprep.subr.mxu0 0.0
    %619 = vmatpush1.msra.mxu0 0.0
    %620 = vmatprep.subr.mxu0 0.0
    %621 = vmatpush1.msra.mxu0 0.0
    %622 = vmatprep.subr.mxu0 0.0
    %623 = vmatpush1.msra.mxu0 0.0
    %624 = vmatprep.subr.mxu0 0.0
    %625 = vmatpush1.msra.mxu0 0.0
    %626 = vmatprep.subr.mxu0 0.0
    %627 = vmatpush1.msra.mxu0 0.0
    %628 = vmatprep.subr.mxu0 0.0
    %629 = vmatpush1.msra.mxu0 0.0
    %630 = vmatprep.subr.mxu0 0.0
    %631 = vmatpush1.msra.mxu0 0.0
    %632 = vmatprep.subr.mxu0 0.0
    %633 = vmatpush1.msra.mxu0 0.0
    %634 = vmatprep.subr.mxu0 0.0
    %635 = vmatpush1.msra.mxu0 0.0
    %636 = vmatprep.subr.mxu0 0.0
    %637 = vmatpush1.msra.mxu0 0.0
    %638 = vmatprep.subr.mxu0 0.0
    %639 = vmatpush1.msra.mxu0 0.0
    %640 = vmatprep.subr.mxu0 0.0
    %641 = vmatpush1.msra.mxu0 0.0
    %642 = vmatprep.subr.mxu0 0.0
    %643 = vmatpush1.msra.mxu0 0.0
    %644 = vmatprep.subr.mxu0 0.0
    %645 = vmatpush1.msra.mxu0 0.0
    %646 = vmatprep.subr.mxu0 0.0
    %647 = vmatpush1.msra.mxu0 0.0
    %648 = vmatprep.subr.mxu0 0.0
    %649 = vmatpush1.msra.mxu0 0.0
    %650 = vmatprep.mubr.f32.mxu0 0.0
    %651 = vmatmul.mubr.f32.gmra.mrb[0].mxu0 %v513
    %v652 = vpop.f32.mrb[0].mxu0
    %v653 = vadd.f32 0.0, %v652
    %v654 = vpop.f32.mrb[0].mxu0
    %v655 = vadd.f32 0.0, %v654
    %656 = vdwg.mxu0
    %v657 = vld [vmem:[%s5] sm:$0xff]
    %v658 = vld [vmem:[#allocation3] sm:$0xff]
    %v660 = vsel %vm59, %v657, 0
    %662 = vmatprep.subr.mxu0 0.0
    %663 = vmatpush1.msra.mxu0 %v658
    %664 = vmatprep.subr.mxu0 0.0
    %665 = vmatpush1.msra.mxu0 0.0
    %666 = vmatprep.subr.mxu0 0.0
    %667 = vmatpush1.msra.mxu0 0.0
    %668 = vmatprep.subr.mxu0 0.0
    %669 = vmatpush1.msra.mxu0 0.0
    %670 = vmatprep.subr.mxu0 0.0
    %671 = vmatpush1.msra.mxu0 0.0
    %672 = vmatprep.subr.mxu0 0.0
    %673 = vmatpush1.msra.mxu0 0.0
    %674 = vmatprep.subr.mxu0 0.0
    %675 = vmatpush1.msra.mxu0 0.0
    %676 = vmatprep.subr.mxu0 0.0
    %677 = vmatpush1.msra.mxu0 0.0
    %678 = vmatprep.subr.mxu0 0.0
    %679 = vmatpush1.msra.mxu0 0.0
    %680 = vmatprep.subr.mxu0 0.0
    %681 = vmatpush1.msra.mxu0 0.0
    %682 = vmatprep.subr.mxu0 0.0
    %683 = vmatpush1.msra.mxu0 0.0
    %684 = vmatprep.subr.mxu0 0.0
    %685 = vmatpush1.msra.mxu0 0.0
    %686 = vmatprep.subr.mxu0 0.0
    %687 = vmatpush1.msra.mxu0 0.0
    %688 = vmatprep.subr.mxu0 0.0
    %689 = vmatpush1.msra.mxu0 0.0
    %690 = vmatprep.subr.mxu0 0.0
    %691 = vmatpush1.msra.mxu0 0.0
    %692 = vmatprep.subr.mxu0 0.0
    %693 = vmatpush1.msra.mxu0 0.0
    %694 = vmatprep.subr.mxu0 0.0
    %695 = vmatpush1.msra.mxu0 0.0
    %696 = vmatprep.subr.mxu0 0.0
    %697 = vmatpush1.msra.mxu0 0.0
    %698 = vmatprep.subr.mxu0 0.0
    %699 = vmatpush1.msra.mxu0 0.0
    %700 = vmatprep.subr.mxu0 0.0
    %701 = vmatpush1.msra.mxu0 0.0
    %702 = vmatprep.subr.mxu0 0.0
    %703 = vmatpush1.msra.mxu0 0.0
    %704 = vmatprep.subr.mxu0 0.0
    %705 = vmatpush1.msra.mxu0 0.0
    %706 = vmatprep.subr.mxu0 0.0
    %707 = vmatpush1.msra.mxu0 0.0
    %708 = vmatprep.subr.mxu0 0.0
    %709 = vmatpush1.msra.mxu0 0.0
    %710 = vmatprep.subr.mxu0 0.0
    %711 = vmatpush1.msra.mxu0 0.0
    %712 = vmatprep.subr.mxu0 0.0
    %713 = vmatpush1.msra.mxu0 0.0
    %714 = vmatprep.subr.mxu0 0.0
    %715 = vmatpush1.msra.mxu0 0.0
    %716 = vmatprep.subr.mxu0 0.0
    %717 = vmatpush1.msra.mxu0 0.0
    %718 = vmatprep.subr.mxu0 0.0
    %719 = vmatpush1.msra.mxu0 0.0
    %720 = vmatprep.subr.mxu0 0.0
    %721 = vmatpush1.msra.mxu0 0.0
    %722 = vmatprep.subr.mxu0 0.0
    %723 = vmatpush1.msra.mxu0 0.0
    %724 = vmatprep.subr.mxu0 0.0
    %725 = vmatpush1.msra.mxu0 0.0
    %726 = vmatprep.mubr.f32.mxu0 0.0
    %727 = vmatmul.mubr.f32.gmra.mrb[0].mxu0 %v660
    %v728 = vpop.f32.mrb[0].mxu0
    %v729 = vadd.f32 0.0, %v728
    %v730 = vpop.f32.mrb[0].mxu0
    %731 = vdwg.mxu0
    %v732 = vadd.f32 %v582, %v729
    %v733 = vsel %vm462, %v732, 0.0
    %734 = vadd.xlane.f32.xlu0 %v733
    %v735 = vpop.xlane.xlu0 %734
    %v736 = vadd.f32 %v735, 0.0
    %v737 = vmul.f32 %v732, %v732
    %v738 = vsel %vm462, %v737, 0.0
    %739 = vadd.xlane.f32.xlu0 %v738
    %v740 = vpop.xlane.xlu0 %739
    %v741 = vadd.f32 %v740, 0.0
    %743 = vrot.lane.b32.xlu0 %v729, 32
    %v744 = vpop.permute.xlu0 %743
    %v746 = vadd.f32 %v582, %v744
    %748 = vrot.lane.b32.xlu0 %v746, 96
    %v749 = vpop.permute.xlu0 %748
    %v751 = vsel %vm462, %v749, 0.0
    %752 = vadd.xlane.f32.xlu0 %v751
    %v753 = vpop.xlane.xlu0 %752
    %v754 = vadd.f32 %v736, %v753
    %v755 = vmul.f32 %v746, %v746
    %757 = vrot.lane.b32.xlu0 %v755, 96
    %v758 = vpop.permute.xlu0 %757
    %v760 = vsel %vm462, %v758, 0.0
    %761 = vadd.xlane.f32.xlu0 %v760
    %v762 = vpop.xlane.xlu0 %761
    %v763 = vadd.f32 %v741, %v762
    %764 = vrot.lane.b32.xlu0 %v729, 64
    %v765 = vpop.permute.xlu0 %764
    %v767 = vadd.f32 %v582, %v765
    %769 = vrot.lane.b32.xlu0 %v767, 64
    %v770 = vpop.permute.xlu0 %769
    %v772 = vsel %vm462, %v770, 0.0
    %773 = vadd.xlane.f32.xlu0 %v772
    %v774 = vpop.xlane.xlu0 %773
    %v775 = vadd.f32 %v754, %v774
    %v776 = vmul.f32 %v767, %v767
    %778 = vrot.lane.b32.xlu0 %v776, 64
    %v779 = vpop.permute.xlu0 %778
    %v781 = vsel %vm462, %v779, 0.0
    %782 = vadd.xlane.f32.xlu0 %v781
    %v783 = vpop.xlane.xlu0 %782
    %v784 = vadd.f32 %v763, %v783
    %785 = vrot.lane.b32.xlu0 %v729, 96
    %v786 = vpop.permute.xlu0 %785
    %v788 = vadd.f32 %v582, %v786
    %790 = vrot.lane.b32.xlu0 %v788, 32
    %v791 = vpop.permute.xlu0 %790
    %v793 = vsel %vm462, %v791, 0.0
    %794 = vadd.xlane.f32.xlu0 %v793
    %v795 = vpop.xlane.xlu0 %794
    %v796 = vadd.f32 %v775, %v795
    %v797 = vmul.f32 %v788, %v788
    %799 = vrot.lane.b32.xlu0 %v797, 32
    %v800 = vpop.permute.xlu0 %799
    %v802 = vsel %vm462, %v800, 0.0
    %803 = vadd.xlane.f32.xlu0 %v802
    %v804 = vpop.xlane.xlu0 %803
    %v805 = vadd.f32 %v784, %v804
    %v806 = vadd.f32 %v584, %v729
    %v807 = vsel %vm462, %v806, 0.0
    %808 = vadd.xlane.f32.xlu0 %v807
    %v809 = vpop.xlane.xlu0 %808
    %v810 = vadd.f32 %v796, %v809
    %v811 = vmul.f32 %v806, %v806
    %v812 = vsel %vm462, %v811, 0.0
    %813 = vadd.xlane.f32.xlu0 %v812
    %v814 = vpop.xlane.xlu0 %813
    %v815 = vadd.f32 %v805, %v814
    %v816 = vadd.f32 %v584, %v744
    %818 = vrot.lane.b32.xlu0 %v816, 96
    %v819 = vpop.permute.xlu0 %818
    %v821 = vsel %vm462, %v819, 0.0
    %822 = vadd.xlane.f32.xlu0 %v821
    %v823 = vpop.xlane.xlu0 %822
    %v824 = vadd.f32 %v810, %v823
    %v825 = vmul.f32 %v816, %v816
    %827 = vrot.lane.b32.xlu0 %v825, 96
    %v828 = vpop.permute.xlu0 %827
    %v830 = vsel %vm462, %v828, 0.0
    %831 = vadd.xlane.f32.xlu0 %v830
    %v832 = vpop.xlane.xlu0 %831
    %v833 = vadd.f32 %v815, %v832
    %v834 = vadd.f32 %v584, %v765
    %836 = vrot.lane.b32.xlu0 %v834, 64
    %v837 = vpop.permute.xlu0 %836
    %v839 = vsel %vm462, %v837, 0.0
    %840 = vadd.xlane.f32.xlu0 %v839
    %v841 = vpop.xlane.xlu0 %840
    %v842 = vadd.f32 %v824, %v841
    %v843 = vmul.f32 %v834, %v834
    %845 = vrot.lane.b32.xlu0 %v843, 64
    %v846 = vpop.permute.xlu0 %845
    %v848 = vsel %vm462, %v846, 0.0
    %849 = vadd.xlane.f32.xlu0 %v848
    %v850 = vpop.xlane.xlu0 %849
    %v851 = vadd.f32 %v833, %v850
    %v852 = vadd.f32 %v584, %v786
    %854 = vrot.lane.b32.xlu0 %v852, 32
    %v855 = vpop.permute.xlu0 %854
    %v857 = vsel %vm462, %v855, 0.0
    %858 = vadd.xlane.f32.xlu0 %v857
    %v859 = vpop.xlane.xlu0 %858
    %v860 = vadd.f32 %v842, %v859
    %v861 = vmul.f32 %v852, %v852
    %863 = vrot.lane.b32.xlu0 %v861, 32
    %v864 = vpop.permute.xlu0 %863
    %v866 = vsel %vm462, %v864, 0.0
    %867 = vadd.xlane.f32.xlu0 %v866
    %v868 = vpop.xlane.xlu0 %867
    %v869 = vadd.f32 %v851, %v868
    %v870 = vmul.f32 %v860, 0.00390625
    %v871 = vmul.f32 %v869, 0.00390625
    %v872 = vmul.f32 %v870, %v870
    %v873 = vsub.f32 %v871, %v872
    %v874 = vmax.f32 %v873, 0.0
    %v875 = vadd.f32 %v874, 1e-05
    %v876 = vrsqrt.pop %v875
    %v877 = vsub.f32 %v732, %v870
    %v878 = vmul.f32 %v877, %v876
    %v879 = vmax.f32 %v878, 0.0
    %v880 = vsel %vm462, %v879, 0.0
    %881 = vadd.xlane.f32.xlu0 %v880
    %v882 = vpop.xlane.xlu0 %881
    %v883 = vadd.f32 %v882, 0.0
    %v884 = vsub.f32 %v746, %v870
    %v885 = vmul.f32 %v884, %v876
    %v886 = vmax.f32 %v885, 0.0
    %888 = vrot.lane.b32.xlu0 %v886, 96
    %v889 = vpop.permute.xlu0 %888
    %v891 = vsel %vm462, %v889, 0.0
    %892 = vadd.xlane.f32.xlu0 %v891
    %v893 = vpop.xlane.xlu0 %892
    %v894 = vadd.f32 %v883, %v893
    %v895 = vmax.f32 %v879, %v889
    %v896 = vsub.f32 %v767, %v870
    %v897 = vmul.f32 %v896, %v876
    %v898 = vmax.f32 %v897, 0.0
    %900 = vrot.lane.b32.xlu0 %v898, 64
    %v901 = vpop.permute.xlu0 %900
    %v903 = vsel %vm462, %v901, 0.0
    %904 = vadd.xlane.f32.xlu0 %v903
    %v905 = vpop.xlane.xlu0 %904
    %v906 = vadd.f32 %v894, %v905
    %v907 = vmax.f32 %v895, %v901
    %v908 = vsub.f32 %v788, %v870
    %v909 = vmul.f32 %v908, %v876
    %v910 = vmax.f32 %v909, 0.0
    %912 = vrot.lane.b32.xlu0 %v910, 32
    %v913 = vpop.permute.xlu0 %912
    %v915 = vsel %vm462, %v913, 0.0
    %916 = vadd.xlane.f32.xlu0 %v915
    %v917 = vpop.xlane.xlu0 %916
    %v918 = vadd.f32 %v906, %v917
    %v919 = vmax.f32 %v907, %v913
    %v920 = vsub.f32 %v806, %v870
    %v921 = vmul.f32 %v920, %v876
    %v922 = vmax.f32 %v921, 0.0
    %v923 = vsel %vm462, %v922, 0.0
    %924 = vadd.xlane.f32.xlu0 %v923
    %v925 = vpop.xlane.xlu0 %924
    %v926 = vadd.f32 %v918, %v925
    %v927 = vmax.f32 %v919, %v922
    %v928 = vsub.f32 %v816, %v870
    %v929 = vmul.f32 %v928, %v876
    %v930 = vmax.f32 %v929, 0.0
    %932 = vrot.lane.b32.xlu0 %v930, 96
    %v933 = vpop.permute.xlu0 %932
    %v935 = vsel %vm462, %v933, 0.0
    %936 = vadd.xlane.f32.xlu0 %v935
    %v937 = vpop.xlane.xlu0 %936
    %v938 = vadd.f32 %v926, %v937
    %v939 = vmax.f32 %v927, %v933
    %v940 = vsub.f32 %v834, %v870
    %v941 = vmul.f32 %v940, %v876
    %v942 = vmax.f32 %v941, 0.0
    %944 = vrot.lane.b32.xlu0 %v942, 64
    %v945 = vpop.permute.xlu0 %944
    %v947 = vsel %vm462, %v945, 0.0
    %948 = vadd.xlane.f32.xlu0 %v947
    %v949 = vpop.xlane.xlu0 %948
    %v950 = vadd.f32 %v938, %v949
    %v951 = vmax.f32 %v939, %v945
    %v952 = vsub.f32 %v852, %v870
    %v953 = vmul.f32 %v952, %v876
    %v954 = vmax.f32 %v953, 0.0
    %956 = vrot.lane.b32.xlu0 %v954, 32
    %v957 = vpop.permute.xlu0 %956
    %v959 = vsel %vm462, %v957, 0.0
    %960 = vadd.xlane.f32.xlu0 %v959
    %v961 = vpop.xlane.xlu0 %960
    %v962 = vadd.f32 %v950, %v961
    %v963 = vmax.f32 %v951, %v957
    %v964 = vmul.f32 %v962, 0.00390625
    %965 = vst.msk [vmem:[#allocation5] sm:$0xff] %vm232, %v964
    %v966 = vadd.f32 %v653, %v786
    %v967 = vsel %vm462, %v966, 0.0
    %968 = vadd.xlane.f32.xlu0 %v967
    %v969 = vpop.xlane.xlu0 %968
    %v970 = vadd.f32 %v969, 0.0
    %v971 = vmul.f32 %v966, %v966
    %v972 = vsel %vm462, %v971, 0.0
    %973 = vadd.xlane.f32.xlu0 %v972
    %v974 = vpop.xlane.xlu0 %973
    %v975 = vadd.f32 %v974, 0.0
    %v976 = vadd.f32 %v653, %v729
    %978 = vrot.lane.b32.xlu0 %v976, 96
    %v979 = vpop.permute.xlu0 %978
    %v981 = vsel %vm462, %v979, 0.0
    %982 = vadd.xlane.f32.xlu0 %v981
    %v983 = vpop.xlane.xlu0 %982
    %v984 = vadd.f32 %v970, %v983
    %v985 = vmul.f32 %v976, %v976
    %987 = vrot.lane.b32.xlu0 %v985, 96
    %v988 = vpop.permute.xlu0 %987
    %v990 = vsel %vm462, %v988, 0.0
    %991 = vadd.xlane.f32.xlu0 %v990
    %v992 = vpop.xlane.xlu0 %991
    %v993 = vadd.f32 %v975, %v992
    %v994 = vadd.f32 %v653, %v744
    %996 = vrot.lane.b32.xlu0 %v994, 64
    %v997 = vpop.permute.xlu0 %996
    %v999 = vsel %vm462, %v997, 0.0
    %1000 = vadd.xlane.f32.xlu0 %v999
    %v1001 = vpop.xlane.xlu0 %1000
    %v1002 = vadd.f32 %v984, %v1001
    %v1003 = vmul.f32 %v994, %v994
    %1005 = vrot.lane.b32.xlu0 %v1003, 64
    %v1006 = vpop.permute.xlu0 %1005
    %v1008 = vsel %vm462, %v1006, 0.0
    %1009 = vadd.xlane.f32.xlu0 %v1008
    %v1010 = vpop.xlane.xlu0 %1009
    %v1011 = vadd.f32 %v993, %v1010
    %v1012 = vadd.f32 %v653, %v765
    %1014 = vrot.lane.b32.xlu0 %v1012, 32
    %v1015 = vpop.permute.xlu0 %1014
    %v1017 = vsel %vm462, %v1015, 0.0
    %1018 = vadd.xlane.f32.xlu0 %v1017
    %v1019 = vpop.xlane.xlu0 %1018
    %v1020 = vadd.f32 %v1002, %v1019
    %v1021 = vmul.f32 %v1012, %v1012
    %1023 = vrot.lane.b32.xlu0 %v1021, 32
    %v1024 = vpop.permute.xlu0 %1023
    %v1026 = vsel %vm462, %v1024, 0.0
    %1027 = vadd.xlane.f32.xlu0 %v1026
    %v1028 = vpop.xlane.xlu0 %1027
    %v1029 = vadd.f32 %v1011, %v1028
    %v1030 = vadd.f32 %v655, %v786
    %v1031 = vsel %vm462, %v1030, 0.0
    %1032 = vadd.xlane.f32.xlu0 %v1031
    %v1033 = vpop.xlane.xlu0 %1032
    %v1034 = vadd.f32 %v1020, %v1033
    %v1035 = vmul.f32 %v1030, %v1030
    %v1036 = vsel %vm462, %v1035, 0.0
    %1037 = vadd.xlane.f32.xlu0 %v1036
    %v1038 = vpop.xlane.xlu0 %1037
    %v1039 = vadd.f32 %v1029, %v1038
    %v1040 = vadd.f32 %v655, %v729
    %1042 = vrot.lane.b32.xlu0 %v1040, 96
    %v1043 = vpop.permute.xlu0 %1042
    %v1045 = vsel %vm462, %v1043, 0.0
    %1046 = vadd.xlane.f32.xlu0 %v1045
    %v1047 = vpop.xlane.xlu0 %1046
    %v1048 = vadd.f32 %v1034, %v1047
    %v1049 = vmul.f32 %v1040, %v1040
    %1051 = vrot.lane.b32.xlu0 %v1049, 96
    %v1052 = vpop.permute.xlu0 %1051
    %v1054 = vsel %vm462, %v1052, 0.0
    %1055 = vadd.xlane.f32.xlu0 %v1054
    %v1056 = vpop.xlane.xlu0 %1055
    %v1057 = vadd.f32 %v1039, %v1056
    %v1058 = vadd.f32 %v655, %v744
    %1060 = vrot.lane.b32.xlu0 %v1058, 64
    %v1061 = vpop.permute.xlu0 %1060
    %v1063 = vsel %vm462, %v1061, 0.0
    %1064 = vadd.xlane.f32.xlu0 %v1063
    %v1065 = vpop.xlane.xlu0 %1064
    %v1066 = vadd.f32 %v1048, %v1065
    %v1067 = vmul.f32 %v1058, %v1058
    %1069 = vrot.lane.b32.xlu0 %v1067, 64
    %v1070 = vpop.permute.xlu0 %1069
    %v1072 = vsel %vm462, %v1070, 0.0
    %1073 = vadd.xlane.f32.xlu0 %v1072
    %v1074 = vpop.xlane.xlu0 %1073
    %v1075 = vadd.f32 %v1057, %v1074
    %v1076 = vadd.f32 %v655, %v765
    %1078 = vrot.lane.b32.xlu0 %v1076, 32
    %v1079 = vpop.permute.xlu0 %1078
    %v1081 = vsel %vm462, %v1079, 0.0
    %1082 = vadd.xlane.f32.xlu0 %v1081
    %v1083 = vpop.xlane.xlu0 %1082
    %v1084 = vadd.f32 %v1066, %v1083
    %v1085 = vmul.f32 %v1076, %v1076
    %1087 = vrot.lane.b32.xlu0 %v1085, 32
    %v1088 = vpop.permute.xlu0 %1087
    %v1090 = vsel %vm462, %v1088, 0.0
    %1091 = vadd.xlane.f32.xlu0 %v1090
    %v1092 = vpop.xlane.xlu0 %1091
    %v1093 = vadd.f32 %v1075, %v1092
    %v1094 = vmul.f32 %v1084, 0.00390625
    %v1095 = vmul.f32 %v1093, 0.00390625
    %v1096 = vmul.f32 %v1094, %v1094
    %v1097 = vsub.f32 %v1095, %v1096
    %v1098 = vmax.f32 %v1097, 0.0
    %v1099 = vadd.f32 %v1098, 1e-05
    %v1100 = vrsqrt.pop %v1099
    %v1101 = vsub.f32 %v966, %v1094
    %v1102 = vmul.f32 %v1101, %v1100
    %v1103 = vmax.f32 %v1102, 0.0
    %v1104 = vsel %vm462, %v1103, 0.0
    %1105 = vadd.xlane.f32.xlu0 %v1104
    %v1106 = vpop.xlane.xlu0 %1105
    %v1107 = vadd.f32 %v1106, 0.0
    %v1108 = vsub.f32 %v976, %v1094
    %v1109 = vmul.f32 %v1108, %v1100
    %v1110 = vmax.f32 %v1109, 0.0
    %1112 = vrot.lane.b32.xlu0 %v1110, 96
    %v1113 = vpop.permute.xlu0 %1112
    %v1115 = vsel %vm462, %v1113, 0.0
    %1116 = vadd.xlane.f32.xlu0 %v1115
    %v1117 = vpop.xlane.xlu0 %1116
    %v1118 = vadd.f32 %v1107, %v1117
    %v1119 = vmax.f32 %v1103, %v1113
    %v1120 = vsub.f32 %v994, %v1094
    %v1121 = vmul.f32 %v1120, %v1100
    %v1122 = vmax.f32 %v1121, 0.0
    %1124 = vrot.lane.b32.xlu0 %v1122, 64
    %v1125 = vpop.permute.xlu0 %1124
    %v1127 = vsel %vm462, %v1125, 0.0
    %1128 = vadd.xlane.f32.xlu0 %v1127
    %v1129 = vpop.xlane.xlu0 %1128
    %v1130 = vadd.f32 %v1118, %v1129
    %v1131 = vmax.f32 %v1119, %v1125
    %v1132 = vsub.f32 %v1012, %v1094
    %v1133 = vmul.f32 %v1132, %v1100
    %v1134 = vmax.f32 %v1133, 0.0
    %1136 = vrot.lane.b32.xlu0 %v1134, 32
    %v1137 = vpop.permute.xlu0 %1136
    %v1139 = vsel %vm462, %v1137, 0.0
    %1140 = vadd.xlane.f32.xlu0 %v1139
    %v1141 = vpop.xlane.xlu0 %1140
    %v1142 = vadd.f32 %v1130, %v1141
    %v1143 = vmax.f32 %v1131, %v1137
    %v1144 = vsub.f32 %v1030, %v1094
    %v1145 = vmul.f32 %v1144, %v1100
    %v1146 = vmax.f32 %v1145, 0.0
    %v1147 = vsel %vm462, %v1146, 0.0
    %1148 = vadd.xlane.f32.xlu0 %v1147
    %v1149 = vpop.xlane.xlu0 %1148
    %v1150 = vadd.f32 %v1142, %v1149
    %v1151 = vmax.f32 %v1143, %v1146
    %v1152 = vsub.f32 %v1040, %v1094
    %v1153 = vmul.f32 %v1152, %v1100
    %v1154 = vmax.f32 %v1153, 0.0
    %1156 = vrot.lane.b32.xlu0 %v1154, 96
    %v1157 = vpop.permute.xlu0 %1156
    %v1159 = vsel %vm462, %v1157, 0.0
    %1160 = vadd.xlane.f32.xlu0 %v1159
    %v1161 = vpop.xlane.xlu0 %1160
    %v1162 = vadd.f32 %v1150, %v1161
    %v1163 = vmax.f32 %v1151, %v1157
    %v1164 = vsub.f32 %v1058, %v1094
    %v1165 = vmul.f32 %v1164, %v1100
    %v1166 = vmax.f32 %v1165, 0.0
    %1168 = vrot.lane.b32.xlu0 %v1166, 64
    %v1169 = vpop.permute.xlu0 %1168
    %v1171 = vsel %vm462, %v1169, 0.0
    %1172 = vadd.xlane.f32.xlu0 %v1171
    %v1173 = vpop.xlane.xlu0 %1172
    %v1174 = vadd.f32 %v1162, %v1173
    %v1175 = vmax.f32 %v1163, %v1169
    %v1176 = vsub.f32 %v1076, %v1094
    %v1177 = vmul.f32 %v1176, %v1100
    %v1178 = vmax.f32 %v1177, 0.0
    %1180 = vrot.lane.b32.xlu0 %v1178, 32
    %v1181 = vpop.permute.xlu0 %1180
    %v1183 = vsel %vm462, %v1181, 0.0
    %1184 = vadd.xlane.f32.xlu0 %v1183
    %v1185 = vpop.xlane.xlu0 %1184
    %v1186 = vadd.f32 %v1174, %v1185
    %v1187 = vmax.f32 %v1175, %v1181
    %v1188 = vmul.f32 %v1186, 0.00390625
    %1189 = vst.msk [vmem:[#allocation5] sm:$0xff] %vm261, %v1188
    %v1190 = vld [vmem:[%s6] sm:$0x3]
    %v1191 = vld [vmem:[#allocation5] sm:$0xff]
    %v1193 = vsel %vm59, %v1190, 0
    %1195 = vmatprep.subr.mxu0 0.0
    %1196 = vmatpush1.msra.mxu0 %v1191
    %1197 = vmatprep.subr.mxu0 0.0
    %1198 = vmatpush1.msra.mxu0 0.0
    %1199 = vmatprep.subr.mxu0 0.0
    %1200 = vmatpush1.msra.mxu0 0.0
    %1201 = vmatprep.subr.mxu0 0.0
    %1202 = vmatpush1.msra.mxu0 0.0
    %1203 = vmatprep.subr.mxu0 0.0
    %1204 = vmatpush1.msra.mxu0 0.0
    %1205 = vmatprep.subr.mxu0 0.0
    %1206 = vmatpush1.msra.mxu0 0.0
    %1207 = vmatprep.subr.mxu0 0.0
    %1208 = vmatpush1.msra.mxu0 0.0
    %1209 = vmatprep.subr.mxu0 0.0
    %1210 = vmatpush1.msra.mxu0 0.0
    %1211 = vmatprep.subr.mxu0 0.0
    %1212 = vmatpush1.msra.mxu0 0.0
    %1213 = vmatprep.subr.mxu0 0.0
    %1214 = vmatpush1.msra.mxu0 0.0
    %1215 = vmatprep.subr.mxu0 0.0
    %1216 = vmatpush1.msra.mxu0 0.0
    %1217 = vmatprep.subr.mxu0 0.0
    %1218 = vmatpush1.msra.mxu0 0.0
    %1219 = vmatprep.subr.mxu0 0.0
    %1220 = vmatpush1.msra.mxu0 0.0
    %1221 = vmatprep.subr.mxu0 0.0
    %1222 = vmatpush1.msra.mxu0 0.0
    %1223 = vmatprep.subr.mxu0 0.0
    %1224 = vmatpush1.msra.mxu0 0.0
    %1225 = vmatprep.subr.mxu0 0.0
    %1226 = vmatpush1.msra.mxu0 0.0
    %1227 = vmatprep.subr.mxu0 0.0
    %1228 = vmatpush1.msra.mxu0 0.0
    %1229 = vmatprep.subr.mxu0 0.0
    %1230 = vmatpush1.msra.mxu0 0.0
    %1231 = vmatprep.subr.mxu0 0.0
    %1232 = vmatpush1.msra.mxu0 0.0
    %1233 = vmatprep.subr.mxu0 0.0
    %1234 = vmatpush1.msra.mxu0 0.0
    %1235 = vmatprep.subr.mxu0 0.0
    %1236 = vmatpush1.msra.mxu0 0.0
    %1237 = vmatprep.subr.mxu0 0.0
    %1238 = vmatpush1.msra.mxu0 0.0
    %1239 = vmatprep.subr.mxu0 0.0
    %1240 = vmatpush1.msra.mxu0 0.0
    %1241 = vmatprep.subr.mxu0 0.0
    %1242 = vmatpush1.msra.mxu0 0.0
    %1243 = vmatprep.subr.mxu0 0.0
    %1244 = vmatpush1.msra.mxu0 0.0
    %1245 = vmatprep.subr.mxu0 0.0
    %1246 = vmatpush1.msra.mxu0 0.0
    %1247 = vmatprep.subr.mxu0 0.0
    %1248 = vmatpush1.msra.mxu0 0.0
    %1249 = vmatprep.subr.mxu0 0.0
    %1250 = vmatpush1.msra.mxu0 0.0
    %1251 = vmatprep.subr.mxu0 0.0
    %1252 = vmatpush1.msra.mxu0 0.0
    %1253 = vmatprep.subr.mxu0 0.0
    %1254 = vmatpush1.msra.mxu0 0.0
    %1255 = vmatprep.subr.mxu0 0.0
    %1256 = vmatpush1.msra.mxu0 0.0
    %1257 = vmatprep.subr.mxu0 0.0
    %1258 = vmatpush1.msra.mxu0 0.0
    %1259 = vmatprep.mubr.f32.mxu0 0.0
    %1260 = vmatmul.mubr.f32.gmra.mrb[0].mxu0 %v1193
    %v1261 = vpop.f32.mrb[0].mxu0
    %v1262 = vadd.f32 0.0, %v1261
    %v1263 = vpop.f32.mrb[0].mxu0
    %1264 = vdwg.mxu0
    %v1265 = vmax.f32 %v1262, 0.0
    %v1266 = vld [vmem:[%s7] sm:$0xff]
    %v1268 = vsel %vm340, %v1266, 0
    %v1271 = vsel %vm344, %v1265, 0
    %1273 = vmatprep.subr.mxu0 0.0
    %1274 = vmatpush1.msra.mxu0 %v1271
    %1275 = vmatprep.subr.mxu0 0.0
    %1276 = vmatpush1.msra.mxu0 0.0
    %1277 = vmatprep.subr.mxu0 0.0
    %1278 = vmatpush1.msra.mxu0 0.0
    %1279 = vmatprep.subr.mxu0 0.0
    %1280 = vmatpush1.msra.mxu0 0.0
    %1281 = vmatprep.subr.mxu0 0.0
    %1282 = vmatpush1.msra.mxu0 0.0
    %1283 = vmatprep.subr.mxu0 0.0
    %1284 = vmatpush1.msra.mxu0 0.0
    %1285 = vmatprep.subr.mxu0 0.0
    %1286 = vmatpush1.msra.mxu0 0.0
    %1287 = vmatprep.subr.mxu0 0.0
    %1288 = vmatpush1.msra.mxu0 0.0
    %1289 = vmatprep.subr.mxu0 0.0
    %1290 = vmatpush1.msra.mxu0 0.0
    %1291 = vmatprep.subr.mxu0 0.0
    %1292 = vmatpush1.msra.mxu0 0.0
    %1293 = vmatprep.subr.mxu0 0.0
    %1294 = vmatpush1.msra.mxu0 0.0
    %1295 = vmatprep.subr.mxu0 0.0
    %1296 = vmatpush1.msra.mxu0 0.0
    %1297 = vmatprep.subr.mxu0 0.0
    %1298 = vmatpush1.msra.mxu0 0.0
    %1299 = vmatprep.subr.mxu0 0.0
    %1300 = vmatpush1.msra.mxu0 0.0
    %1301 = vmatprep.subr.mxu0 0.0
    %1302 = vmatpush1.msra.mxu0 0.0
    %1303 = vmatprep.subr.mxu0 0.0
    %1304 = vmatpush1.msra.mxu0 0.0
    %1305 = vmatprep.subr.mxu0 0.0
    %1306 = vmatpush1.msra.mxu0 0.0
    %1307 = vmatprep.subr.mxu0 0.0
    %1308 = vmatpush1.msra.mxu0 0.0
    %1309 = vmatprep.subr.mxu0 0.0
    %1310 = vmatpush1.msra.mxu0 0.0
    %1311 = vmatprep.subr.mxu0 0.0
    %1312 = vmatpush1.msra.mxu0 0.0
    %1313 = vmatprep.subr.mxu0 0.0
    %1314 = vmatpush1.msra.mxu0 0.0
    %1315 = vmatprep.subr.mxu0 0.0
    %1316 = vmatpush1.msra.mxu0 0.0
    %1317 = vmatprep.subr.mxu0 0.0
    %1318 = vmatpush1.msra.mxu0 0.0
    %1319 = vmatprep.subr.mxu0 0.0
    %1320 = vmatpush1.msra.mxu0 0.0
    %1321 = vmatprep.subr.mxu0 0.0
    %1322 = vmatpush1.msra.mxu0 0.0
    %1323 = vmatprep.subr.mxu0 0.0
    %1324 = vmatpush1.msra.mxu0 0.0
    %1325 = vmatprep.subr.mxu0 0.0
    %1326 = vmatpush1.msra.mxu0 0.0
    %1327 = vmatprep.subr.mxu0 0.0
    %1328 = vmatpush1.msra.mxu0 0.0
    %1329 = vmatprep.subr.mxu0 0.0
    %1330 = vmatpush1.msra.mxu0 0.0
    %1331 = vmatprep.subr.mxu0 0.0
    %1332 = vmatpush1.msra.mxu0 0.0
    %1333 = vmatprep.subr.mxu0 0.0
    %1334 = vmatpush1.msra.mxu0 0.0
    %1335 = vmatprep.subr.mxu0 0.0
    %1336 = vmatpush1.msra.mxu0 0.0
    %1337 = vmatprep.mubr.f32.mxu0 0.0
    %1338 = vmatmul.mubr.f32.gmra.mrb[0].mxu0 %v1268
    %v1339 = vpop.f32.mrb[0].mxu0
    %v1340 = vadd.f32 0.0, %v1339
    %v1341 = vpop.f32.mrb[0].mxu0
    %1342 = vdwg.mxu0
    %v1343 = vxor.u32 %v1340, 2147483648
    %v1344 = vmul.f32 %v1343, 1.442695
    %v1345 = vpow.pop %v1344
    %v1346 = vadd.f32 %v1345, 1.0
    %v1347 = vrcp.pop %v1346
    %v1348 = vmul.f32 1.0, %v1347
    %1350 = vset.pattern.permute.xlu0 0
    %1351 = vperm.xlu0 %1350, %v1348
    %v1352 = vpop.permute.xlu0 %1351
    %v1354 = vmul.f32 %v963, %v1352
    %1355 = vst.msk [vmem:[#allocation11] sm:$0xff] %vm462, %v1354
    %1356 = vset.pattern.permute.xlu0 1
    %1357 = vperm.xlu0 %1356, %v1348
    %v1358 = vpop.permute.xlu0 %1357
    %v1360 = vmul.f32 %v1187, %v1358
    %1362 = vrot.lane.b32.xlu0 %v1360, 32
    %v1363 = vpop.permute.xlu0 %1362
    %1365 = vst.msk [vmem:[#allocation11] sm:$0xff] %vm505, %v1363
    // Predicated region
    $region42: #{tpu_custom_call.1} parent=1 // pred_check
      _
    $region43: #{tpu_custom_call.1} parent=1 // pred_check_branch
      %1367 = sbr.rel (0) target = $region45
    $region44: #{tpu_custom_call.1} parent=1 // pred_region
      %s1369 = ssub.s32 128, 128
      %1370 = vsyncadd [#allocation8], %s1369
      %s1372 = sshll.u32 [#allocation11], 4
      %s1373 = int_to_ptr.vmem [resolvable:$true] %s1372
      %1375 = dma.vmem_to_hbm [thread:$0]  %s1373, 128, %s8, [#allocation8]
    $region45: #{tpu_custom_call.1} parent=1 // pred_fallthru
      _
    // Predicated region
    $region46: #{tpu_custom_call.1} parent=1 // pred_check
      _
    $region47: #{tpu_custom_call.1} parent=1 // pred_check_branch
      %1377 = sbr.rel (0) target = $region49
    $region48: #{tpu_custom_call.1} parent=1 // pred_region
      %1378 = dma.done [#allocation8], 128
    $region49: #{tpu_custom_call.1} parent=1 // pred_fallthru
      _
    %1379 = vsyncpa [#allocation7], 1
    %1380 = vsyncpa [#allocation10], 1
    %1381 = vsyncpa [#allocation8], 1

</llo_original>
